<compile_context>
chip_gen: v7x
topology: tpu7x:2x2x1
jax: 0.10.0
libtpu: 0.0.40
codegen_flags: <defaults>
</compile_context>

<pallas_src>
from functools import partial

import jax
import jax.numpy as jnp
import numpy as np
from jax.experimental import pallas as pl
from jax.experimental.pallas import tpu as pltpu


# ---------------------------------------------------------------------------
# Fused RCAB kernel: conv3x3 -> PReLU -> conv3x3 -> CA -> residual
# ---------------------------------------------------------------------------
def _rcab_kernel(x_ref, mask_ref, w1_ref, b1_ref, a1_ref, w2_ref, b2_ref,
                 w1m_ref, w1s_ref, cb1_ref, cal_ref, cw2_ref, cb2_ref,
                 o_ref, *, H, W, skip):
    HW = H * W
    x = x_ref[0].astype(jnp.float32)                      # (C, HW)

    def conv3x3(inp, w_ref, b_ref):
        cout = w_ref.shape[1]
        acc = jnp.zeros((cout, HW), jnp.float32)
        for ky in range(3):
            for kx in range(3):
                dy, dx = ky - 1, kx - 1
                k = ky * 3 + kx
                s = dy * W + dx                           # shift in flattened HW
                if s == 0:
                    shifted = inp
                else:
                    # shifted[:, i] = inp[:, i + s]; wrapped entries are masked
                    # (reproduces the zero padding of the PyTorch conv).
                    shifted = pltpu.roll(inp, shift=(-s) % HW, axis=1)
                    shifted = shifted * mask_ref[k]       # (1, HW) border mask
                acc = acc + jnp.dot(w_ref[k], shifted,
                                    preferred_element_type=jnp.float32)
        return acc + b_ref[...]                           # bias (C, 1)

    h = conv3x3(x, w1_ref, b1_ref)
    h = jnp.where(h >= 0, h, a1_ref[...] * h)             # PReLU, per-channel
    y = conv3x3(h, w2_ref, b2_ref)                        # (C, HW) f32

    # ---- CA statistics (exactly mean / sqrt(mean((y - m)^2)) as in PyTorch)
    inv_hw = 1.0 / HW
    mean = jnp.sum(y, axis=1, keepdims=True) * inv_hw     # (C, 1)
    d = y - mean
    std = jnp.sqrt(jnp.sum(d * d, axis=1, keepdims=True) * inv_hw)

    # ---- CA "FC" stack (1x1 convs == tiny matmuls on column vectors)
    hfc = (jnp.dot(w1m_ref[...], mean, preferred_element_type=jnp.float32)
           + jnp.dot(w1s_ref[...], std, preferred_element_type=jnp.float32)
           + cb1_ref[...])                                 # (Hd, 1)
    hfc = jnp.where(hfc >= 0, hfc, cal_ref[...] * hfc)     # PReLU(Hd)
    a = jax.nn.sigmoid(
        jnp.dot(cw2_ref[...], hfc, preferred_element_type=jnp.float32)
        + cb2_ref[...])                                    # (C, 1)
    if skip:
        a = a + 1.0        # fold CA's internal skip (y*a + y) into the scale

    # ---- scale + outer residual, written once
    o_ref[0] = (y * a + x).astype(o_ref.dtype)


# ---------------------------------------------------------------------------
# Helpers
# ---------------------------------------------------------------------------
def _vmem_limit(need_bytes):
    # Explicit scoped-VMEM budget (default is only 16/32 MiB); capped at 64 MiB
    # so it is valid on every generation (v7x physical VMEM = 64 MiB).
    return int(min(64 * 2**20, max(32 * 2**20, need_bytes)))


def _conv_taps_mask(H, W):
    """(9, 1, HW) f32 border masks, tap k = ky*3 + kx, offsets (ky-1, kx-1)."""
    HW = H * W
    col = np.arange(HW, dtype=np.int64)
    hh, ww = col // W, col % W
    masks = []
    for ky in range(3):
        for kx in range(3):
            dy, dx = ky - 1, kx - 1
            valid = ((hh + dy >= 0) & (hh + dy < H) &
                     (ww + dx >= 0) & (ww + dx < W))
            masks.append(valid)
    return np.stack(masks).astype(np.float32).reshape(9, 1, HW)


# ---------------------------------------------------------------------------
# Parameters
# ---------------------------------------------------------------------------
def init_rcab_params(key, in_channels):
    """Synthetic parameters matching the PyTorch RCAB module shapes
    (act == nn.PReLU with the default 0.25 init; RCAB hard-codes reduction=4)."""
    C = in_channels
    Hd = (2 * C) // 4
    assert Hd >= 1
    ks = jax.random.split(key, 8)
    return dict(
        conv1_w=jax.random.normal(ks[0], (C, C, 3, 3), jnp.float32) * 0.1,
        conv1_b=jax.random.normal(ks[1], (C,), jnp.float32) * 0.1,
        act1_alpha=jnp.full((C,), 0.25, jnp.float32),
        conv2_w=jax.random.normal(ks[2], (C, C, 3, 3), jnp.float32) * 0.1,
        conv2_b=jax.random.normal(ks[3], (C,), jnp.float32) * 0.1,
        ca_w1=jax.random.normal(ks[4], (Hd, 2 * C), jnp.float32) * 0.1,
        ca_b1=jax.random.normal(ks[5], (Hd,), jnp.float32) * 0.1,
        ca_alpha=jnp.full((Hd,), 0.25, jnp.float32),
        ca_w2=jax.random.normal(ks[6], (C, Hd), jnp.float32) * 0.1,
        ca_b2=jax.random.normal(ks[7], (C,), jnp.float32) * 0.1,
    )


def prepare_params(p):
    """One-time re-layout of parameters into kernel-friendly shapes."""
    C = p["conv1_b"].shape[0]
    Hd = p["ca_b1"].shape[0]

    def conv_taps(w):  # (Cout, Cin, 3, 3) -> (9, Cout, Cin), tap k = ky*3 + kx
        return jnp.transpose(w, (2, 3, 0, 1)).reshape(9, w.shape[0], w.shape[1])

    return dict(
        w1=conv_taps(p["conv1_w"]), b1=p["conv1_b"].reshape(C, 1),
        a1=p["act1_alpha"].reshape(C, 1),
        w2=conv_taps(p["conv2_w"]), b2=p["conv2_b"].reshape(C, 1),
        # CA 1x1-conv stack; W1 split into the halves acting on mean and std.
        ca_w1m=p["ca_w1"][:, :C],            # (Hd, C)  acts on the mean
        ca_w1s=p["ca_w1"][:, C:],            # (Hd, C)  acts on the std
        ca_b1=p["ca_b1"].reshape(Hd, 1),
        ca_alpha=p["ca_alpha"].reshape(Hd, 1),
        ca_w2=p["ca_w2"],                    # (C, Hd)
        ca_b2=p["ca_b2"].reshape(C, 1),
    )


# ---------------------------------------------------------------------------
# Forward
# ---------------------------------------------------------------------------
def rcab_forward(x, kp, *, skip_connection=True):
    """x: (N, C, H, W).  kp: output of prepare_params()."""
    N, C, H, W = x.shape
    HW = H * W
    Hd = kp["ca_b1"].shape[0]
    dtype = x.dtype
    isz = dtype.itemsize

    x2 = x.reshape(N, C, HW)
    taps_mask = jnp.asarray(_conv_taps_mask(H, W))

    # Rough per-step VMEM need: double-buffered x/out slabs + ~10 f32 slabs of
    # intermediates/rolls + masks + params.
    slab_f32 = C * HW * 4
    need = 4 * C * HW * isz + 10 * slab_f32 + 2 * 9 * HW * 4 + (1 << 20)

    kernel = partial(_rcab_kernel, H=H, W=W, skip=skip_connection)
    out = pl.pallas_call(
        kernel,
        out_shape=jax.ShapeDtypeStruct((N, C, HW), dtype),
        grid_spec=pltpu.PrefetchScalarGridSpec(
            num_scalar_prefetch=0,
            grid=(N,),
            in_specs=[
                pl.BlockSpec((1, C, HW), lambda i: (i, 0, 0)),    # x
                pl.BlockSpec((9, 1, HW), lambda i: (0, 0, 0)),    # border masks
                pl.BlockSpec((9, C, C), lambda i: (0, 0, 0)),     # conv1 taps
                pl.BlockSpec((C, 1), lambda i: (0, 0)),           # conv1 bias
                pl.BlockSpec((C, 1), lambda i: (0, 0)),           # PReLU1 alpha
                pl.BlockSpec((9, C, C), lambda i: (0, 0, 0)),     # conv2 taps
                pl.BlockSpec((C, 1), lambda i: (0, 0)),           # conv2 bias
                pl.BlockSpec((Hd, C), lambda i: (0, 0)),          # CA W1 (mean)
                pl.BlockSpec((Hd, C), lambda i: (0, 0)),          # CA W1 (std)
                pl.BlockSpec((Hd, 1), lambda i: (0, 0)),          # CA b1
                pl.BlockSpec((Hd, 1), lambda i: (0, 0)),          # CA PReLU alpha
                pl.BlockSpec((C, Hd), lambda i: (0, 0)),          # CA W2
                pl.BlockSpec((C, 1), lambda i: (0, 0)),           # CA b2
            ],
            out_specs=pl.BlockSpec((1, C, HW), lambda i: (i, 0, 0)),
        ),
        compiler_params=pltpu.CompilerParams(
            dimension_semantics=("parallel",),
            vmem_limit_bytes=_vmem_limit(need)),
    )(x2, taps_mask, kp["w1"], kp["b1"], kp["a1"], kp["w2"], kp["b2"],
      kp["ca_w1m"], kp["ca_w1s"], kp["ca_b1"], kp["ca_alpha"],
      kp["ca_w2"], kp["ca_b2"])

    return out.reshape(N, C, H, W)


# ---------------------------------------------------------------------------
# Pure-JAX reference replicating the PyTorch forward
# ---------------------------------------------------------------------------
def rcab_reference(x, p, *, skip_connection=True):
    HI = jax.lax.Precision.HIGHEST

    def conv3x3(v, w, b):
        out = jax.lax.conv_general_dilated(
            v, w, window_strides=(1, 1), padding=((1, 1), (1, 1)),
            dimension_numbers=("NCHW", "OIHW", "NCHW"), precision=HI)
        return out + b.reshape(1, -1, 1, 1)

    h = conv3x3(x, p["conv1_w"], p["conv1_b"])
    al = p["act1_alpha"].reshape(1, -1, 1, 1)
    h = jnp.where(h >= 0, h, al * h)
    y = conv3x3(h, p["conv2_w"], p["conv2_b"])

    m = jnp.mean(y, axis=(2, 3), keepdims=True)
    s = jnp.sqrt(jnp.mean((y - m) ** 2, axis=(2, 3), keepdims=True))
    cat = jnp.concatenate([m, s], axis=1)[:, :, 0, 0]                 # (N, 2C)
    hf = jnp.dot(cat, p["ca_w1"].T, precision=HI) + p["ca_b1"]
    hf = jnp.where(hf >= 0, hf, p["ca_alpha"] * hf)
    a = jax.nn.sigmoid(jnp.dot(hf, p["ca_w2"].T, precision=HI) + p["ca_b2"])
    a = a[:, :, None, None]
    ca_out = y * a + y if skip_connection else y * a
    return ca_out + x


if __name__ == "__main__":
    N, C, H, W = 2, 4, 16, 16
    skip_connection = True

    key = jax.random.PRNGKey(0)
    kx, kparam = jax.random.split(key)
    x = jax.random.normal(kx, (N, C, H, W), jnp.float32)
    params = init_rcab_params(kparam, C)
    kparams = prepare_params(params)

    out = rcab_forward(x, kparams, skip_connection=skip_connection)
    out = jax.block_until_ready(out)

    ref = rcab_reference(x, params, skip_connection=skip_connection)
    np.testing.assert_allclose(np.asarray(out), np.asarray(ref),
                               rtol=1e-4, atol=1e-4)
    print("KERNEL_OK")
</pallas_src>

<mosaic_0001>
module attributes {stable_mosaic.version = 11 : i64} {
  func.func @_rcab_kernel(%arg0: i32, %arg1: memref<1x4x256xf32, #tpu.memory_space<vmem>>, %arg2: memref<9x1x256xf32, #tpu.memory_space<vmem>>, %arg3: memref<9x4x4xf32, #tpu.memory_space<vmem>>, %arg4: memref<4x1xf32, #tpu.memory_space<vmem>>, %arg5: memref<4x1xf32, #tpu.memory_space<vmem>>, %arg6: memref<9x4x4xf32, #tpu.memory_space<vmem>>, %arg7: memref<4x1xf32, #tpu.memory_space<vmem>>, %arg8: memref<2x4xf32, #tpu.memory_space<vmem>>, %arg9: memref<2x4xf32, #tpu.memory_space<vmem>>, %arg10: memref<2x1xf32, #tpu.memory_space<vmem>>, %arg11: memref<2x1xf32, #tpu.memory_space<vmem>>, %arg12: memref<4x2xf32, #tpu.memory_space<vmem>>, %arg13: memref<4x1xf32, #tpu.memory_space<vmem>>, %arg14: memref<1x4x256xf32, #tpu.memory_space<vmem>>) attributes {dimension_semantics = [#tpu.dimension_semantics<parallel>], iteration_bounds = array<i64: 2>, scalar_prefetch = 0 : i64, scratch_operands = 0 : i64, tpu.core_type = #tpu.core_type<tc>, window_params = [{transform_indices = @transform_0, window_bounds = array<i64: 1, 4, 256>}, {pipeline_mode = #tpu.pipeline_mode<synchronous>, transform_indices = @transform_1, window_bounds = array<i64: 9, 1, 256>}, {pipeline_mode = #tpu.pipeline_mode<synchronous>, transform_indices = @transform_2, window_bounds = array<i64: 9, 4, 4>}, {pipeline_mode = #tpu.pipeline_mode<synchronous>, transform_indices = @transform_3, window_bounds = array<i64: 4, 1>}, {pipeline_mode = #tpu.pipeline_mode<synchronous>, transform_indices = @transform_4, window_bounds = array<i64: 4, 1>}, {pipeline_mode = #tpu.pipeline_mode<synchronous>, transform_indices = @transform_5, window_bounds = array<i64: 9, 4, 4>}, {pipeline_mode = #tpu.pipeline_mode<synchronous>, transform_indices = @transform_6, window_bounds = array<i64: 4, 1>}, {pipeline_mode = #tpu.pipeline_mode<synchronous>, transform_indices = @transform_7, window_bounds = array<i64: 2, 4>}, {pipeline_mode = #tpu.pipeline_mode<synchronous>, transform_indices = @transform_8, window_bounds = array<i64: 2, 4>}, {pipeline_mode = #tpu.pipeline_mode<synchronous>, transform_indices = @transform_9, window_bounds = array<i64: 2, 1>}, {pipeline_mode = #tpu.pipeline_mode<synchronous>, transform_indices = @transform_10, window_bounds = array<i64: 2, 1>}, {pipeline_mode = #tpu.pipeline_mode<synchronous>, transform_indices = @transform_11, window_bounds = array<i64: 4, 2>}, {pipeline_mode = #tpu.pipeline_mode<synchronous>, transform_indices = @transform_12, window_bounds = array<i64: 4, 1>}, {transform_indices = @transform_13, window_bounds = array<i64: 1, 4, 256>}]} {
    %c0 = arith.constant 0 : index
    %c0_0 = arith.constant 0 : index
    %c0_1 = arith.constant 0 : index
    %0 = vector.load %arg1[%c0, %c0_0, %c0_1] : memref<1x4x256xf32, #tpu.memory_space<vmem>>, vector<1x4x256xf32>
    %1 = vector.shape_cast %0 : vector<1x4x256xf32> to vector<4x256xf32>
    %cst = arith.constant 0.000000e+00 : f32
    %2 = vector.broadcast %cst : f32 to vector<4x256xf32>
    %c17_i32 = arith.constant 17 : i32
    %3 = tpu.dynamic_rotate %1 by %c17_i32 dim 1 : vector<4x256xf32>, i32 -> vector<4x256xf32>
    %c0_2 = arith.constant 0 : index
    %c0_3 = arith.constant 0 : index
    %c0_4 = arith.constant 0 : index
    %4 = vector.load %arg2[%c0_2, %c0_3, %c0_4] : memref<9x1x256xf32, #tpu.memory_space<vmem>>, vector<1x1x256xf32>
    %5 = vector.shape_cast %4 : vector<1x1x256xf32> to vector<1x256xf32>
    %6 = vector.broadcast %5 : vector<1x256xf32> to vector<4x256xf32>
    %7 = arith.mulf %3, %6 : vector<4x256xf32>
    %c0_5 = arith.constant 0 : index
    %c0_6 = arith.constant 0 : index
    %c0_7 = arith.constant 0 : index
    %8 = vector.load %arg3[%c0_5, %c0_6, %c0_7] : memref<9x4x4xf32, #tpu.memory_space<vmem>>, vector<1x4x4xf32>
    %9 = vector.shape_cast %8 : vector<1x4x4xf32> to vector<4x4xf32>
    %cst_8 = arith.constant dense<0.000000e+00> : vector<4x256xf32>
    %10 = tpu.matmul %9, %7, %cst_8 {dimension_numbers = #tpu.dot_dimension_numbers<[1], [0], [0], [1], [0, 0, 1, 1], [], []>} : vector<4x4xf32>, vector<4x256xf32>, vector<4x256xf32> -> vector<4x256xf32>
    %11 = arith.addf %2, %10 : vector<4x256xf32>
    %c16_i32 = arith.constant 16 : i32
    %12 = tpu.dynamic_rotate %1 by %c16_i32 dim 1 : vector<4x256xf32>, i32 -> vector<4x256xf32>
    %c1 = arith.constant 1 : index
    %c0_9 = arith.constant 0 : index
    %c0_10 = arith.constant 0 : index
    %13 = vector.load %arg2[%c1, %c0_9, %c0_10] : memref<9x1x256xf32, #tpu.memory_space<vmem>>, vector<1x1x256xf32>
    %14 = vector.shape_cast %13 : vector<1x1x256xf32> to vector<1x256xf32>
    %15 = vector.broadcast %14 : vector<1x256xf32> to vector<4x256xf32>
    %16 = arith.mulf %12, %15 : vector<4x256xf32>
    %c1_11 = arith.constant 1 : index
    %c0_12 = arith.constant 0 : index
    %c0_13 = arith.constant 0 : index
    %17 = vector.load %arg3[%c1_11, %c0_12, %c0_13] : memref<9x4x4xf32, #tpu.memory_space<vmem>>, vector<1x4x4xf32>
    %18 = vector.shape_cast %17 : vector<1x4x4xf32> to vector<4x4xf32>
    %cst_14 = arith.constant dense<0.000000e+00> : vector<4x256xf32>
    %19 = tpu.matmul %18, %16, %cst_14 {dimension_numbers = #tpu.dot_dimension_numbers<[1], [0], [0], [1], [0, 0, 1, 1], [], []>} : vector<4x4xf32>, vector<4x256xf32>, vector<4x256xf32> -> vector<4x256xf32>
    %20 = arith.addf %11, %19 : vector<4x256xf32>
    %c15_i32 = arith.constant 15 : i32
    %21 = tpu.dynamic_rotate %1 by %c15_i32 dim 1 : vector<4x256xf32>, i32 -> vector<4x256xf32>
    %c2 = arith.constant 2 : index
    %c0_15 = arith.constant 0 : index
    %c0_16 = arith.constant 0 : index
    %22 = vector.load %arg2[%c2, %c0_15, %c0_16] : memref<9x1x256xf32, #tpu.memory_space<vmem>>, vector<1x1x256xf32>
    %23 = vector.shape_cast %22 : vector<1x1x256xf32> to vector<1x256xf32>
    %24 = vector.broadcast %23 : vector<1x256xf32> to vector<4x256xf32>
    %25 = arith.mulf %21, %24 : vector<4x256xf32>
    %c2_17 = arith.constant 2 : index
    %c0_18 = arith.constant 0 : index
    %c0_19 = arith.constant 0 : index
    %26 = vector.load %arg3[%c2_17, %c0_18, %c0_19] : memref<9x4x4xf32, #tpu.memory_space<vmem>>, vector<1x4x4xf32>
    %27 = vector.shape_cast %26 : vector<1x4x4xf32> to vector<4x4xf32>
    %cst_20 = arith.constant dense<0.000000e+00> : vector<4x256xf32>
    %28 = tpu.matmul %27, %25, %cst_20 {dimension_numbers = #tpu.dot_dimension_numbers<[1], [0], [0], [1], [0, 0, 1, 1], [], []>} : vector<4x4xf32>, vector<4x256xf32>, vector<4x256xf32> -> vector<4x256xf32>
    %29 = arith.addf %20, %28 : vector<4x256xf32>
    %c1_i32 = arith.constant 1 : i32
    %30 = tpu.dynamic_rotate %1 by %c1_i32 dim 1 : vector<4x256xf32>, i32 -> vector<4x256xf32>
    %c3 = arith.constant 3 : index
    %c0_21 = arith.constant 0 : index
    %c0_22 = arith.constant 0 : index
    %31 = vector.load %arg2[%c3, %c0_21, %c0_22] : memref<9x1x256xf32, #tpu.memory_space<vmem>>, vector<1x1x256xf32>
    %32 = vector.shape_cast %31 : vector<1x1x256xf32> to vector<1x256xf32>
    %33 = vector.broadcast %32 : vector<1x256xf32> to vector<4x256xf32>
    %34 = arith.mulf %30, %33 : vector<4x256xf32>
    %c3_23 = arith.constant 3 : index
    %c0_24 = arith.constant 0 : index
    %c0_25 = arith.constant 0 : index
    %35 = vector.load %arg3[%c3_23, %c0_24, %c0_25] : memref<9x4x4xf32, #tpu.memory_space<vmem>>, vector<1x4x4xf32>
    %36 = vector.shape_cast %35 : vector<1x4x4xf32> to vector<4x4xf32>
    %cst_26 = arith.constant dense<0.000000e+00> : vector<4x256xf32>
    %37 = tpu.matmul %36, %34, %cst_26 {dimension_numbers = #tpu.dot_dimension_numbers<[1], [0], [0], [1], [0, 0, 1, 1], [], []>} : vector<4x4xf32>, vector<4x256xf32>, vector<4x256xf32> -> vector<4x256xf32>
    %38 = arith.addf %29, %37 : vector<4x256xf32>
    %c4 = arith.constant 4 : index
    %c0_27 = arith.constant 0 : index
    %c0_28 = arith.constant 0 : index
    %39 = vector.load %arg3[%c4, %c0_27, %c0_28] : memref<9x4x4xf32, #tpu.memory_space<vmem>>, vector<1x4x4xf32>
    %40 = vector.shape_cast %39 : vector<1x4x4xf32> to vector<4x4xf32>
    %cst_29 = arith.constant dense<0.000000e+00> : vector<4x256xf32>
    %41 = tpu.matmul %40, %1, %cst_29 {dimension_numbers = #tpu.dot_dimension_numbers<[1], [0], [0], [1], [0, 0, 1, 1], [], []>} : vector<4x4xf32>, vector<4x256xf32>, vector<4x256xf32> -> vector<4x256xf32>
    %42 = arith.addf %38, %41 : vector<4x256xf32>
    %c255_i32 = arith.constant 255 : i32
    %43 = tpu.dynamic_rotate %1 by %c255_i32 dim 1 : vector<4x256xf32>, i32 -> vector<4x256xf32>
    %c5 = arith.constant 5 : index
    %c0_30 = arith.constant 0 : index
    %c0_31 = arith.constant 0 : index
    %44 = vector.load %arg2[%c5, %c0_30, %c0_31] : memref<9x1x256xf32, #tpu.memory_space<vmem>>, vector<1x1x256xf32>
    %45 = vector.shape_cast %44 : vector<1x1x256xf32> to vector<1x256xf32>
    %46 = vector.broadcast %45 : vector<1x256xf32> to vector<4x256xf32>
    %47 = arith.mulf %43, %46 : vector<4x256xf32>
    %c5_32 = arith.constant 5 : index
    %c0_33 = arith.constant 0 : index
    %c0_34 = arith.constant 0 : index
    %48 = vector.load %arg3[%c5_32, %c0_33, %c0_34] : memref<9x4x4xf32, #tpu.memory_space<vmem>>, vector<1x4x4xf32>
    %49 = vector.shape_cast %48 : vector<1x4x4xf32> to vector<4x4xf32>
    %cst_35 = arith.constant dense<0.000000e+00> : vector<4x256xf32>
    %50 = tpu.matmul %49, %47, %cst_35 {dimension_numbers = #tpu.dot_dimension_numbers<[1], [0], [0], [1], [0, 0, 1, 1], [], []>} : vector<4x4xf32>, vector<4x256xf32>, vector<4x256xf32> -> vector<4x256xf32>
    %51 = arith.addf %42, %50 : vector<4x256xf32>
    %c241_i32 = arith.constant 241 : i32
    %52 = tpu.dynamic_rotate %1 by %c241_i32 dim 1 : vector<4x256xf32>, i32 -> vector<4x256xf32>
    %c6 = arith.constant 6 : index
    %c0_36 = arith.constant 0 : index
    %c0_37 = arith.constant 0 : index
    %53 = vector.load %arg2[%c6, %c0_36, %c0_37] : memref<9x1x256xf32, #tpu.memory_space<vmem>>, vector<1x1x256xf32>
    %54 = vector.shape_cast %53 : vector<1x1x256xf32> to vector<1x256xf32>
    %55 = vector.broadcast %54 : vector<1x256xf32> to vector<4x256xf32>
    %56 = arith.mulf %52, %55 : vector<4x256xf32>
    %c6_38 = arith.constant 6 : index
    %c0_39 = arith.constant 0 : index
    %c0_40 = arith.constant 0 : index
    %57 = vector.load %arg3[%c6_38, %c0_39, %c0_40] : memref<9x4x4xf32, #tpu.memory_space<vmem>>, vector<1x4x4xf32>
    %58 = vector.shape_cast %57 : vector<1x4x4xf32> to vector<4x4xf32>
    %cst_41 = arith.constant dense<0.000000e+00> : vector<4x256xf32>
    %59 = tpu.matmul %58, %56, %cst_41 {dimension_numbers = #tpu.dot_dimension_numbers<[1], [0], [0], [1], [0, 0, 1, 1], [], []>} : vector<4x4xf32>, vector<4x256xf32>, vector<4x256xf32> -> vector<4x256xf32>
    %60 = arith.addf %51, %59 : vector<4x256xf32>
    %c240_i32 = arith.constant 240 : i32
    %61 = tpu.dynamic_rotate %1 by %c240_i32 dim 1 : vector<4x256xf32>, i32 -> vector<4x256xf32>
    %c7 = arith.constant 7 : index
    %c0_42 = arith.constant 0 : index
    %c0_43 = arith.constant 0 : index
    %62 = vector.load %arg2[%c7, %c0_42, %c0_43] : memref<9x1x256xf32, #tpu.memory_space<vmem>>, vector<1x1x256xf32>
    %63 = vector.shape_cast %62 : vector<1x1x256xf32> to vector<1x256xf32>
    %64 = vector.broadcast %63 : vector<1x256xf32> to vector<4x256xf32>
    %65 = arith.mulf %61, %64 : vector<4x256xf32>
    %c7_44 = arith.constant 7 : index
    %c0_45 = arith.constant 0 : index
    %c0_46 = arith.constant 0 : index
    %66 = vector.load %arg3[%c7_44, %c0_45, %c0_46] : memref<9x4x4xf32, #tpu.memory_space<vmem>>, vector<1x4x4xf32>
    %67 = vector.shape_cast %66 : vector<1x4x4xf32> to vector<4x4xf32>
    %cst_47 = arith.constant dense<0.000000e+00> : vector<4x256xf32>
    %68 = tpu.matmul %67, %65, %cst_47 {dimension_numbers = #tpu.dot_dimension_numbers<[1], [0], [0], [1], [0, 0, 1, 1], [], []>} : vector<4x4xf32>, vector<4x256xf32>, vector<4x256xf32> -> vector<4x256xf32>
    %69 = arith.addf %60, %68 : vector<4x256xf32>
    %c239_i32 = arith.constant 239 : i32
    %70 = tpu.dynamic_rotate %1 by %c239_i32 dim 1 : vector<4x256xf32>, i32 -> vector<4x256xf32>
    %c8 = arith.constant 8 : index
    %c0_48 = arith.constant 0 : index
    %c0_49 = arith.constant 0 : index
    %71 = vector.load %arg2[%c8, %c0_48, %c0_49] : memref<9x1x256xf32, #tpu.memory_space<vmem>>, vector<1x1x256xf32>
    %72 = vector.shape_cast %71 : vector<1x1x256xf32> to vector<1x256xf32>
    %73 = vector.broadcast %72 : vector<1x256xf32> to vector<4x256xf32>
    %74 = arith.mulf %70, %73 : vector<4x256xf32>
    %c8_50 = arith.constant 8 : index
    %c0_51 = arith.constant 0 : index
    %c0_52 = arith.constant 0 : index
    %75 = vector.load %arg3[%c8_50, %c0_51, %c0_52] : memref<9x4x4xf32, #tpu.memory_space<vmem>>, vector<1x4x4xf32>
    %76 = vector.shape_cast %75 : vector<1x4x4xf32> to vector<4x4xf32>
    %cst_53 = arith.constant dense<0.000000e+00> : vector<4x256xf32>
    %77 = tpu.matmul %76, %74, %cst_53 {dimension_numbers = #tpu.dot_dimension_numbers<[1], [0], [0], [1], [0, 0, 1, 1], [], []>} : vector<4x4xf32>, vector<4x256xf32>, vector<4x256xf32> -> vector<4x256xf32>
    %78 = arith.addf %69, %77 : vector<4x256xf32>
    %c0_54 = arith.constant 0 : index
    %c0_55 = arith.constant 0 : index
    %79 = vector.load %arg4[%c0_54, %c0_55] : memref<4x1xf32, #tpu.memory_space<vmem>>, vector<4x1xf32>
    %80 = vector.broadcast %79 : vector<4x1xf32> to vector<4x256xf32>
    %81 = arith.addf %78, %80 : vector<4x256xf32>
    %cst_56 = arith.constant 0.000000e+00 : f32
    %82 = vector.broadcast %cst_56 : f32 to vector<4x256xf32>
    %83 = arith.cmpf oge, %81, %82 : vector<4x256xf32>
    %c0_57 = arith.constant 0 : index
    %c0_58 = arith.constant 0 : index
    %84 = vector.load %arg5[%c0_57, %c0_58] : memref<4x1xf32, #tpu.memory_space<vmem>>, vector<4x1xf32>
    %85 = vector.broadcast %84 : vector<4x1xf32> to vector<4x256xf32>
    %86 = arith.mulf %85, %81 : vector<4x256xf32>
    %87 = arith.select %83, %81, %86 : vector<4x256xi1>, vector<4x256xf32>
    %cst_59 = arith.constant 0.000000e+00 : f32
    %88 = vector.broadcast %cst_59 : f32 to vector<4x256xf32>
    %c17_i32_60 = arith.constant 17 : i32
    %89 = tpu.dynamic_rotate %87 by %c17_i32_60 dim 1 : vector<4x256xf32>, i32 -> vector<4x256xf32>
    %c0_61 = arith.constant 0 : index
    %c0_62 = arith.constant 0 : index
    %c0_63 = arith.constant 0 : index
    %90 = vector.load %arg2[%c0_61, %c0_62, %c0_63] : memref<9x1x256xf32, #tpu.memory_space<vmem>>, vector<1x1x256xf32>
    %91 = vector.shape_cast %90 : vector<1x1x256xf32> to vector<1x256xf32>
    %92 = vector.broadcast %91 : vector<1x256xf32> to vector<4x256xf32>
    %93 = arith.mulf %89, %92 : vector<4x256xf32>
    %c0_64 = arith.constant 0 : index
    %c0_65 = arith.constant 0 : index
    %c0_66 = arith.constant 0 : index
    %94 = vector.load %arg6[%c0_64, %c0_65, %c0_66] : memref<9x4x4xf32, #tpu.memory_space<vmem>>, vector<1x4x4xf32>
    %95 = vector.shape_cast %94 : vector<1x4x4xf32> to vector<4x4xf32>
    %cst_67 = arith.constant dense<0.000000e+00> : vector<4x256xf32>
    %96 = tpu.matmul %95, %93, %cst_67 {dimension_numbers = #tpu.dot_dimension_numbers<[1], [0], [0], [1], [0, 0, 1, 1], [], []>} : vector<4x4xf32>, vector<4x256xf32>, vector<4x256xf32> -> vector<4x256xf32>
    %97 = arith.addf %88, %96 : vector<4x256xf32>
    %c16_i32_68 = arith.constant 16 : i32
    %98 = tpu.dynamic_rotate %87 by %c16_i32_68 dim 1 : vector<4x256xf32>, i32 -> vector<4x256xf32>
    %c1_69 = arith.constant 1 : index
    %c0_70 = arith.constant 0 : index
    %c0_71 = arith.constant 0 : index
    %99 = vector.load %arg2[%c1_69, %c0_70, %c0_71] : memref<9x1x256xf32, #tpu.memory_space<vmem>>, vector<1x1x256xf32>
    %100 = vector.shape_cast %99 : vector<1x1x256xf32> to vector<1x256xf32>
    %101 = vector.broadcast %100 : vector<1x256xf32> to vector<4x256xf32>
    %102 = arith.mulf %98, %101 : vector<4x256xf32>
    %c1_72 = arith.constant 1 : index
    %c0_73 = arith.constant 0 : index
    %c0_74 = arith.constant 0 : index
    %103 = vector.load %arg6[%c1_72, %c0_73, %c0_74] : memref<9x4x4xf32, #tpu.memory_space<vmem>>, vector<1x4x4xf32>
    %104 = vector.shape_cast %103 : vector<1x4x4xf32> to vector<4x4xf32>
    %cst_75 = arith.constant dense<0.000000e+00> : vector<4x256xf32>
    %105 = tpu.matmul %104, %102, %cst_75 {dimension_numbers = #tpu.dot_dimension_numbers<[1], [0], [0], [1], [0, 0, 1, 1], [], []>} : vector<4x4xf32>, vector<4x256xf32>, vector<4x256xf32> -> vector<4x256xf32>
    %106 = arith.addf %97, %105 : vector<4x256xf32>
    %c15_i32_76 = arith.constant 15 : i32
    %107 = tpu.dynamic_rotate %87 by %c15_i32_76 dim 1 : vector<4x256xf32>, i32 -> vector<4x256xf32>
    %c2_77 = arith.constant 2 : index
    %c0_78 = arith.constant 0 : index
    %c0_79 = arith.constant 0 : index
    %108 = vector.load %arg2[%c2_77, %c0_78, %c0_79] : memref<9x1x256xf32, #tpu.memory_space<vmem>>, vector<1x1x256xf32>
    %109 = vector.shape_cast %108 : vector<1x1x256xf32> to vector<1x256xf32>
    %110 = vector.broadcast %109 : vector<1x256xf32> to vector<4x256xf32>
    %111 = arith.mulf %107, %110 : vector<4x256xf32>
    %c2_80 = arith.constant 2 : index
    %c0_81 = arith.constant 0 : index
    %c0_82 = arith.constant 0 : index
    %112 = vector.load %arg6[%c2_80, %c0_81, %c0_82] : memref<9x4x4xf32, #tpu.memory_space<vmem>>, vector<1x4x4xf32>
    %113 = vector.shape_cast %112 : vector<1x4x4xf32> to vector<4x4xf32>
    %cst_83 = arith.constant dense<0.000000e+00> : vector<4x256xf32>
    %114 = tpu.matmul %113, %111, %cst_83 {dimension_numbers = #tpu.dot_dimension_numbers<[1], [0], [0], [1], [0, 0, 1, 1], [], []>} : vector<4x4xf32>, vector<4x256xf32>, vector<4x256xf32> -> vector<4x256xf32>
    %115 = arith.addf %106, %114 : vector<4x256xf32>
    %c1_i32_84 = arith.constant 1 : i32
    %116 = tpu.dynamic_rotate %87 by %c1_i32_84 dim 1 : vector<4x256xf32>, i32 -> vector<4x256xf32>
    %c3_85 = arith.constant 3 : index
    %c0_86 = arith.constant 0 : index
    %c0_87 = arith.constant 0 : index
    %117 = vector.load %arg2[%c3_85, %c0_86, %c0_87] : memref<9x1x256xf32, #tpu.memory_space<vmem>>, vector<1x1x256xf32>
    %118 = vector.shape_cast %117 : vector<1x1x256xf32> to vector<1x256xf32>
    %119 = vector.broadcast %118 : vector<1x256xf32> to vector<4x256xf32>
    %120 = arith.mulf %116, %119 : vector<4x256xf32>
    %c3_88 = arith.constant 3 : index
    %c0_89 = arith.constant 0 : index
    %c0_90 = arith.constant 0 : index
    %121 = vector.load %arg6[%c3_88, %c0_89, %c0_90] : memref<9x4x4xf32, #tpu.memory_space<vmem>>, vector<1x4x4xf32>
    %122 = vector.shape_cast %121 : vector<1x4x4xf32> to vector<4x4xf32>
    %cst_91 = arith.constant dense<0.000000e+00> : vector<4x256xf32>
    %123 = tpu.matmul %122, %120, %cst_91 {dimension_numbers = #tpu.dot_dimension_numbers<[1], [0], [0], [1], [0, 0, 1, 1], [], []>} : vector<4x4xf32>, vector<4x256xf32>, vector<4x256xf32> -> vector<4x256xf32>
    %124 = arith.addf %115, %123 : vector<4x256xf32>
    %c4_92 = arith.constant 4 : index
    %c0_93 = arith.constant 0 : index
    %c0_94 = arith.constant 0 : index
    %125 = vector.load %arg6[%c4_92, %c0_93, %c0_94] : memref<9x4x4xf32, #tpu.memory_space<vmem>>, vector<1x4x4xf32>
    %126 = vector.shape_cast %125 : vector<1x4x4xf32> to vector<4x4xf32>
    %cst_95 = arith.constant dense<0.000000e+00> : vector<4x256xf32>
    %127 = tpu.matmul %126, %87, %cst_95 {dimension_numbers = #tpu.dot_dimension_numbers<[1], [0], [0], [1], [0, 0, 1, 1], [], []>} : vector<4x4xf32>, vector<4x256xf32>, vector<4x256xf32> -> vector<4x256xf32>
    %128 = arith.addf %124, %127 : vector<4x256xf32>
    %c255_i32_96 = arith.constant 255 : i32
    %129 = tpu.dynamic_rotate %87 by %c255_i32_96 dim 1 : vector<4x256xf32>, i32 -> vector<4x256xf32>
    %c5_97 = arith.constant 5 : index
    %c0_98 = arith.constant 0 : index
    %c0_99 = arith.constant 0 : index
    %130 = vector.load %arg2[%c5_97, %c0_98, %c0_99] : memref<9x1x256xf32, #tpu.memory_space<vmem>>, vector<1x1x256xf32>
    %131 = vector.shape_cast %130 : vector<1x1x256xf32> to vector<1x256xf32>
    %132 = vector.broadcast %131 : vector<1x256xf32> to vector<4x256xf32>
    %133 = arith.mulf %129, %132 : vector<4x256xf32>
    %c5_100 = arith.constant 5 : index
    %c0_101 = arith.constant 0 : index
    %c0_102 = arith.constant 0 : index
    %134 = vector.load %arg6[%c5_100, %c0_101, %c0_102] : memref<9x4x4xf32, #tpu.memory_space<vmem>>, vector<1x4x4xf32>
    %135 = vector.shape_cast %134 : vector<1x4x4xf32> to vector<4x4xf32>
    %cst_103 = arith.constant dense<0.000000e+00> : vector<4x256xf32>
    %136 = tpu.matmul %135, %133, %cst_103 {dimension_numbers = #tpu.dot_dimension_numbers<[1], [0], [0], [1], [0, 0, 1, 1], [], []>} : vector<4x4xf32>, vector<4x256xf32>, vector<4x256xf32> -> vector<4x256xf32>
    %137 = arith.addf %128, %136 : vector<4x256xf32>
    %c241_i32_104 = arith.constant 241 : i32
    %138 = tpu.dynamic_rotate %87 by %c241_i32_104 dim 1 : vector<4x256xf32>, i32 -> vector<4x256xf32>
    %c6_105 = arith.constant 6 : index
    %c0_106 = arith.constant 0 : index
    %c0_107 = arith.constant 0 : index
    %139 = vector.load %arg2[%c6_105, %c0_106, %c0_107] : memref<9x1x256xf32, #tpu.memory_space<vmem>>, vector<1x1x256xf32>
    %140 = vector.shape_cast %139 : vector<1x1x256xf32> to vector<1x256xf32>
    %141 = vector.broadcast %140 : vector<1x256xf32> to vector<4x256xf32>
    %142 = arith.mulf %138, %141 : vector<4x256xf32>
    %c6_108 = arith.constant 6 : index
    %c0_109 = arith.constant 0 : index
    %c0_110 = arith.constant 0 : index
    %143 = vector.load %arg6[%c6_108, %c0_109, %c0_110] : memref<9x4x4xf32, #tpu.memory_space<vmem>>, vector<1x4x4xf32>
    %144 = vector.shape_cast %143 : vector<1x4x4xf32> to vector<4x4xf32>
    %cst_111 = arith.constant dense<0.000000e+00> : vector<4x256xf32>
    %145 = tpu.matmul %144, %142, %cst_111 {dimension_numbers = #tpu.dot_dimension_numbers<[1], [0], [0], [1], [0, 0, 1, 1], [], []>} : vector<4x4xf32>, vector<4x256xf32>, vector<4x256xf32> -> vector<4x256xf32>
    %146 = arith.addf %137, %145 : vector<4x256xf32>
    %c240_i32_112 = arith.constant 240 : i32
    %147 = tpu.dynamic_rotate %87 by %c240_i32_112 dim 1 : vector<4x256xf32>, i32 -> vector<4x256xf32>
    %c7_113 = arith.constant 7 : index
    %c0_114 = arith.constant 0 : index
    %c0_115 = arith.constant 0 : index
    %148 = vector.load %arg2[%c7_113, %c0_114, %c0_115] : memref<9x1x256xf32, #tpu.memory_space<vmem>>, vector<1x1x256xf32>
    %149 = vector.shape_cast %148 : vector<1x1x256xf32> to vector<1x256xf32>
    %150 = vector.broadcast %149 : vector<1x256xf32> to vector<4x256xf32>
    %151 = arith.mulf %147, %150 : vector<4x256xf32>
    %c7_116 = arith.constant 7 : index
    %c0_117 = arith.constant 0 : index
    %c0_118 = arith.constant 0 : index
    %152 = vector.load %arg6[%c7_116, %c0_117, %c0_118] : memref<9x4x4xf32, #tpu.memory_space<vmem>>, vector<1x4x4xf32>
    %153 = vector.shape_cast %152 : vector<1x4x4xf32> to vector<4x4xf32>
    %cst_119 = arith.constant dense<0.000000e+00> : vector<4x256xf32>
    %154 = tpu.matmul %153, %151, %cst_119 {dimension_numbers = #tpu.dot_dimension_numbers<[1], [0], [0], [1], [0, 0, 1, 1], [], []>} : vector<4x4xf32>, vector<4x256xf32>, vector<4x256xf32> -> vector<4x256xf32>
    %155 = arith.addf %146, %154 : vector<4x256xf32>
    %c239_i32_120 = arith.constant 239 : i32
    %156 = tpu.dynamic_rotate %87 by %c239_i32_120 dim 1 : vector<4x256xf32>, i32 -> vector<4x256xf32>
    %c8_121 = arith.constant 8 : index
    %c0_122 = arith.constant 0 : index
    %c0_123 = arith.constant 0 : index
    %157 = vector.load %arg2[%c8_121, %c0_122, %c0_123] : memref<9x1x256xf32, #tpu.memory_space<vmem>>, vector<1x1x256xf32>
    %158 = vector.shape_cast %157 : vector<1x1x256xf32> to vector<1x256xf32>
    %159 = vector.broadcast %158 : vector<1x256xf32> to vector<4x256xf32>
    %160 = arith.mulf %156, %159 : vector<4x256xf32>
    %c8_124 = arith.constant 8 : index
    %c0_125 = arith.constant 0 : index
    %c0_126 = arith.constant 0 : index
    %161 = vector.load %arg6[%c8_124, %c0_125, %c0_126] : memref<9x4x4xf32, #tpu.memory_space<vmem>>, vector<1x4x4xf32>
    %162 = vector.shape_cast %161 : vector<1x4x4xf32> to vector<4x4xf32>
    %cst_127 = arith.constant dense<0.000000e+00> : vector<4x256xf32>
    %163 = tpu.matmul %162, %160, %cst_127 {dimension_numbers = #tpu.dot_dimension_numbers<[1], [0], [0], [1], [0, 0, 1, 1], [], []>} : vector<4x4xf32>, vector<4x256xf32>, vector<4x256xf32> -> vector<4x256xf32>
    %164 = arith.addf %155, %163 : vector<4x256xf32>
    %c0_128 = arith.constant 0 : index
    %c0_129 = arith.constant 0 : index
    %165 = vector.load %arg7[%c0_128, %c0_129] : memref<4x1xf32, #tpu.memory_space<vmem>>, vector<4x1xf32>
    %166 = vector.broadcast %165 : vector<4x1xf32> to vector<4x256xf32>
    %167 = arith.addf %164, %166 : vector<4x256xf32>
    %cst_130 = arith.constant dense<0.000000e+00> : vector<4xf32>
    %168 = vector.multi_reduction <add>, %167, %cst_130 [1] : vector<4x256xf32> to vector<4xf32>
    %169 = vector.shape_cast %168 : vector<4xf32> to vector<4x1xf32>
    %cst_131 = arith.constant 3.906250e-03 : f32
    %170 = vector.broadcast %cst_131 : f32 to vector<4x1xf32>
    %171 = arith.mulf %169, %170 : vector<4x1xf32>
    %172 = vector.broadcast %171 : vector<4x1xf32> to vector<4x256xf32>
    %173 = arith.subf %167, %172 : vector<4x256xf32>
    %174 = arith.mulf %173, %173 : vector<4x256xf32>
    %cst_132 = arith.constant dense<0.000000e+00> : vector<4xf32>
    %175 = vector.multi_reduction <add>, %174, %cst_132 [1] : vector<4x256xf32> to vector<4xf32>
    %176 = vector.shape_cast %175 : vector<4xf32> to vector<4x1xf32>
    %cst_133 = arith.constant 3.906250e-03 : f32
    %177 = vector.broadcast %cst_133 : f32 to vector<4x1xf32>
    %178 = arith.mulf %176, %177 : vector<4x1xf32>
    %179 = math.sqrt %178 : vector<4x1xf32>
    %c0_134 = arith.constant 0 : index
    %c0_135 = arith.constant 0 : index
    %180 = vector.load %arg8[%c0_134, %c0_135] : memref<2x4xf32, #tpu.memory_space<vmem>>, vector<2x4xf32>
    %cst_136 = arith.constant dense<0.000000e+00> : vector<2x1xf32>
    %181 = tpu.matmul %180, %171, %cst_136 {dimension_numbers = #tpu.dot_dimension_numbers<[1], [0], [0], [1], [0, 0, 1, 1], [], []>} : vector<2x4xf32>, vector<4x1xf32>, vector<2x1xf32> -> vector<2x1xf32>
    %c0_137 = arith.constant 0 : index
    %c0_138 = arith.constant 0 : index
    %182 = vector.load %arg9[%c0_137, %c0_138] : memref<2x4xf32, #tpu.memory_space<vmem>>, vector<2x4xf32>
    %cst_139 = arith.constant dense<0.000000e+00> : vector<2x1xf32>
    %183 = tpu.matmul %182, %179, %cst_139 {dimension_numbers = #tpu.dot_dimension_numbers<[1], [0], [0], [1], [0, 0, 1, 1], [], []>} : vector<2x4xf32>, vector<4x1xf32>, vector<2x1xf32> -> vector<2x1xf32>
    %184 = arith.addf %181, %183 : vector<2x1xf32>
    %c0_140 = arith.constant 0 : index
    %c0_141 = arith.constant 0 : index
    %185 = vector.load %arg10[%c0_140, %c0_141] : memref<2x1xf32, #tpu.memory_space<vmem>>, vector<2x1xf32>
    %186 = arith.addf %184, %185 : vector<2x1xf32>
    %cst_142 = arith.constant 0.000000e+00 : f32
    %187 = vector.broadcast %cst_142 : f32 to vector<2x1xf32>
    %188 = arith.cmpf oge, %186, %187 : vector<2x1xf32>
    %c0_143 = arith.constant 0 : index
    %c0_144 = arith.constant 0 : index
    %189 = vector.load %arg11[%c0_143, %c0_144] : memref<2x1xf32, #tpu.memory_space<vmem>>, vector<2x1xf32>
    %190 = arith.mulf %189, %186 : vector<2x1xf32>
    %191 = arith.select %188, %186, %190 : vector<2x1xi1>, vector<2x1xf32>
    %c0_145 = arith.constant 0 : index
    %c0_146 = arith.constant 0 : index
    %192 = vector.load %arg12[%c0_145, %c0_146] : memref<4x2xf32, #tpu.memory_space<vmem>>, vector<4x2xf32>
    %cst_147 = arith.constant dense<0.000000e+00> : vector<4x1xf32>
    %193 = tpu.matmul %192, %191, %cst_147 {dimension_numbers = #tpu.dot_dimension_numbers<[1], [0], [0], [1], [0, 0, 1, 1], [], []>} : vector<4x2xf32>, vector<2x1xf32>, vector<4x1xf32> -> vector<4x1xf32>
    %c0_148 = arith.constant 0 : index
    %c0_149 = arith.constant 0 : index
    %194 = vector.load %arg13[%c0_148, %c0_149] : memref<4x1xf32, #tpu.memory_space<vmem>>, vector<4x1xf32>
    %195 = arith.addf %193, %194 : vector<4x1xf32>
    %196 = arith.negf %195 : vector<4x1xf32>
    %197 = math.exp %196 : vector<4x1xf32>
    %cst_150 = arith.constant 1.000000e+00 : f32
    %198 = vector.broadcast %cst_150 : f32 to vector<4x1xf32>
    %199 = arith.addf %198, %197 : vector<4x1xf32>
    %200 = arith.divf %198, %199 : vector<4x1xf32>
    %cst_151 = arith.constant 1.000000e+00 : f32
    %201 = vector.broadcast %cst_151 : f32 to vector<4x1xf32>
    %202 = arith.addf %200, %201 : vector<4x1xf32>
    %203 = vector.broadcast %202 : vector<4x1xf32> to vector<4x256xf32>
    %204 = arith.mulf %167, %203 : vector<4x256xf32>
    %205 = arith.addf %204, %1 : vector<4x256xf32>
    %c0_152 = arith.constant 0 : index
    %c0_153 = arith.constant 0 : index
    %c0_154 = arith.constant 0 : index
    %206 = vector.load %arg14[%c0_152, %c0_153, %c0_154] : memref<1x4x256xf32, #tpu.memory_space<vmem>>, vector<1x4x256xf32>
    %207 = vector.shape_cast %206 : vector<1x4x256xf32> to vector<4x256xf32>
    %208 = vector.shape_cast %205 : vector<4x256xf32> to vector<1x4x256xf32>
    tpu.vector_store %arg14[%c0_152, %c0_153, %c0_154], %208 {strides = array<i32>} : memref<1x4x256xf32, #tpu.memory_space<vmem>>, vector<1x4x256xf32>,
    return
  }
  func.func @transform_0(%arg0: i32) -> (i32, i32, i32) {
    %c0_i32 = arith.constant 0 : i32
    %c0_i32_0 = arith.constant 0 : i32
    %c0_i32_1 = arith.constant 0 : i32
    return %arg0, %c0_i32, %c0_i32_0 : i32, i32, i32
  }
  func.func @transform_1(%arg0: i32) -> (i32, i32, i32) {
    %c0_i32 = arith.constant 0 : i32
    %c0_i32_0 = arith.constant 0 : i32
    %c0_i32_1 = arith.constant 0 : i32
    %c0_i32_2 = arith.constant 0 : i32
    return %c0_i32, %c0_i32_0, %c0_i32_1 : i32, i32, i32
  }
  func.func @transform_2(%arg0: i32) -> (i32, i32, i32) {
    %c0_i32 = arith.constant 0 : i32
    %c0_i32_0 = arith.constant 0 : i32
    %c0_i32_1 = arith.constant 0 : i32
    %c0_i32_2 = arith.constant 0 : i32
    return %c0_i32, %c0_i32_0, %c0_i32_1 : i32, i32, i32
  }
  func.func @transform_3(%arg0: i32) -> (i32, i32) {
    %c0_i32 = arith.constant 0 : i32
    %c0_i32_0 = arith.constant 0 : i32
    %c0_i32_1 = arith.constant 0 : i32
    return %c0_i32, %c0_i32_0 : i32, i32
  }
  func.func @transform_4(%arg0: i32) -> (i32, i32) {
    %c0_i32 = arith.constant 0 : i32
    %c0_i32_0 = arith.constant 0 : i32
    %c0_i32_1 = arith.constant 0 : i32
    return %c0_i32, %c0_i32_0 : i32, i32
  }
  func.func @transform_5(%arg0: i32) -> (i32, i32, i32) {
    %c0_i32 = arith.constant 0 : i32
    %c0_i32_0 = arith.constant 0 : i32
    %c0_i32_1 = arith.constant 0 : i32
    %c0_i32_2 = arith.constant 0 : i32
    return %c0_i32, %c0_i32_0, %c0_i32_1 : i32, i32, i32
  }
  func.func @transform_6(%arg0: i32) -> (i32, i32) {
    %c0_i32 = arith.constant 0 : i32
    %c0_i32_0 = arith.constant 0 : i32
    %c0_i32_1 = arith.constant 0 : i32
    return %c0_i32, %c0_i32_0 : i32, i32
  }
  func.func @transform_7(%arg0: i32) -> (i32, i32) {
    %c0_i32 = arith.constant 0 : i32
    %c0_i32_0 = arith.constant 0 : i32
    %c0_i32_1 = arith.constant 0 : i32
    return %c0_i32, %c0_i32_0 : i32, i32
  }
  func.func @transform_8(%arg0: i32) -> (i32, i32) {
    %c0_i32 = arith.constant 0 : i32
    %c0_i32_0 = arith.constant 0 : i32
    %c0_i32_1 = arith.constant 0 : i32
    return %c0_i32, %c0_i32_0 : i32, i32
  }
  func.func @transform_9(%arg0: i32) -> (i32, i32) {
    %c0_i32 = arith.constant 0 : i32
    %c0_i32_0 = arith.constant 0 : i32
    %c0_i32_1 = arith.constant 0 : i32
    return %c0_i32, %c0_i32_0 : i32, i32
  }
  func.func @transform_10(%arg0: i32) -> (i32, i32) {
    %c0_i32 = arith.constant 0 : i32
    %c0_i32_0 = arith.constant 0 : i32
    %c0_i32_1 = arith.constant 0 : i32
    return %c0_i32, %c0_i32_0 : i32, i32
  }
  func.func @transform_11(%arg0: i32) -> (i32, i32) {
    %c0_i32 = arith.constant 0 : i32
    %c0_i32_0 = arith.constant 0 : i32
    %c0_i32_1 = arith.constant 0 : i32
    return %c0_i32, %c0_i32_0 : i32, i32
  }
  func.func @transform_12(%arg0: i32) -> (i32, i32) {
    %c0_i32 = arith.constant 0 : i32
    %c0_i32_0 = arith.constant 0 : i32
    %c0_i32_1 = arith.constant 0 : i32
    return %c0_i32, %c0_i32_0 : i32, i32
  }
  func.func @transform_13(%arg0: i32) -> (i32, i32, i32) {
    %c0_i32 = arith.constant 0 : i32
    %c0_i32_0 = arith.constant 0 : i32
    %c0_i32_1 = arith.constant 0 : i32
    return %arg0, %c0_i32, %c0_i32_0 : i32, i32, i32
  }
}

</mosaic_0001>

<llo_original>
// kernel: tpu_custom_call.1
$region0: #{tpu_custom_call.1}
  #allocation0 [shape = 'u32[]', space=smem, size = 0x4, offset = 0x4, fixed_abs, tag = 'smem constant byte address 0x4 - core index']
  #allocation1 [shape = 'u32[144,128]{1,0:T(1,128)}', space=vmem, size = 0x12000, scoped, tag = 'internal scratch']
  %s0 = inlined_call_operand.vmem [shape: f32[2,4,256], index: 0, kind: input, shape index: {}]
  %s1 = inlined_call_operand.vmem [shape: f32[9,1,256], index: 1, kind: input, shape index: {}]
  %s2 = inlined_call_operand.vmem [shape: f32[9,4,4], index: 2, kind: input, shape index: {}]
  %s3 = inlined_call_operand.vmem [shape: f32[4,1], index: 3, kind: input, shape index: {}]
  %s4 = inlined_call_operand.vmem [shape: f32[4,1], index: 4, kind: input, shape index: {}]
  %s5 = inlined_call_operand.vmem [shape: f32[9,4,4], index: 5, kind: input, shape index: {}]
  %s6 = inlined_call_operand.vmem [shape: f32[4,1], index: 6, kind: input, shape index: {}]
  %s7 = inlined_call_operand.vmem [shape: f32[2,4], index: 7, kind: input, shape index: {}]
  %s8 = inlined_call_operand.vmem [shape: f32[2,4], index: 8, kind: input, shape index: {}]
  %s9 = inlined_call_operand.vmem [shape: f32[2,1], index: 9, kind: input, shape index: {}]
  %s10 = inlined_call_operand.vmem [shape: f32[2,1], index: 10, kind: input, shape index: {}]
  %s11 = inlined_call_operand.vmem [shape: f32[4,2], index: 11, kind: input, shape index: {}]
  %s12 = inlined_call_operand.vmem [shape: f32[4,1], index: 12, kind: input, shape index: {}]
  %s13 = inlined_call_operand.hbm [shape: f32[2,4,256], index: 13, kind: output, shape index: {}]
  %s14 = sld [smem:[#allocation0]]
  $region85: #{tpu_custom_call.1} parent=0
    _
  %s16 = ssub.s32 1, %s14
  %s17 = scalar_select 0, %s16, %s14
  $region1: #{tpu_custom_call.1} parent=0
    #allocation2 [shape = 'u8[8192]{0}', space=vmem, size = 0x2000, scoped, tag = 'output window, operand 0']
    #allocation3 [shape = 's32[2]{0}', space=sflag, size = 0x8, scoped, tag = 'scoped memory for tpu_custom_call.1']
    %18 = vsyncpa [#allocation3], 0
    %s19 = scalar_lea.sflag [#allocation3], 1
    %20 = vsyncpa %s19, 0
    loop: start=0, step=1, limit=4
    $region2: #{tpu_custom_call.1} parent=1 // loop_pre_header
      _
    $region3: #{tpu_custom_call.1} parent=1 // loop_header
      %s22 = sphi 0, %s26
      %p23 = scmp.ge.s32.totalorder %s22, 4
      %s32 = sphi 0, %s34
      %s35 = sphi 0, %s32
      %s36 = sphi 0, %s35
      %s52 = sphi 0, %s36
      %s56 = sphi 0, %s56
      %s58 = sphi 0, %s56
      %s59 = sphi 0, %s58
      %s73 = sphi 0, %s59
      %s77 = sphi 0, %s77
      %s79 = sphi 0, %s77
      %s80 = sphi 0, %s79
      %s94 = sphi 0, %s80
      %s98 = sphi 0, %s98
      %s100 = sphi 0, %s98
      %s101 = sphi 0, %s100
      %s115 = sphi 0, %s101
      %s119 = sphi 0, %s119
      %s121 = sphi 0, %s119
      %s122 = sphi 0, %s121
      %s136 = sphi 0, %s122
      %s140 = sphi 0, %s140
      %s142 = sphi 0, %s140
      %s143 = sphi 0, %s142
      %s157 = sphi 0, %s143
      %s161 = sphi 0, %s161
      %s163 = sphi 0, %s161
      %s164 = sphi 0, %s163
      %s178 = sphi 0, %s164
      %s182 = sphi 0, %s182
      %s184 = sphi 0, %s182
      %s185 = sphi 0, %s184
      %s199 = sphi 0, %s185
      %s203 = sphi 0, %s203
      %s205 = sphi 0, %s203
      %s206 = sphi 0, %s205
      %s220 = sphi 0, %s206
      %s224 = sphi 0, %s224
      %s226 = sphi 0, %s224
      %s227 = sphi 0, %s226
      %s241 = sphi 0, %s227
      %s245 = sphi 0, %s245
      %s247 = sphi 0, %s245
      %s248 = sphi 0, %s247
      %s262 = sphi 0, %s248
      %s266 = sphi 0, %s266
      %s268 = sphi 0, %s266
      %s269 = sphi 0, %s268
      %s283 = sphi 0, %s269
      %s287 = sphi 0, %s287
      %s289 = sphi 0, %s287
      %s290 = sphi 0, %s289
      %s304 = sphi 0, %s290
      %s310 = sphi 0, %s312
      %s313 = sphi 0, %s310
      %s314 = sphi 0, %s313
      %s330 = sphi 0, %s314
    $region4: #{tpu_custom_call.1} parent=1 // loop_header_branch
      %25 = sbr.rel (%p23) target = $region8
    $region5: #{tpu_custom_call.1} parent=1 // loop_body
      %s27 = ssub.s32 %s22, 1
      %s28 = ssub.s32 %s22, 2
      %s29 = sadd.s32 %s22, 1
      %s30 = ssub.s32 %s22, %s29
      %p31 = scmp.eq.s32.totalorder %s30, 0
      %s33 = sadd.s32 %s32, 1
      %s34 = scalar_select %p31, %s32, %s33
      %p37 = pneg %p31
      %p38 = scmp.eq.s32.totalorder %s22, 1
      %p39 = por %p37, %p38
      %p40 = scmp.ne.s32.totalorder %s32, %s35
      %p41 = scmp.eq.s32.totalorder %s22, 0
      %p42 = por %p40, %p41
      %p43 = scmp.ne.s32.totalorder %s32, %s35
      %p44 = scmp.eq.s32.totalorder %s27, 1
      %p45 = por %p43, %p44
      %p46 = scmp.ne.s32.totalorder %s35, %s36
      %p47 = scmp.eq.s32.totalorder %s27, 0
      %p48 = por %p46, %p47
      %p49 = scmp.ne.s32.totalorder %s35, %s36
      %p50 = scmp.eq.s32.totalorder %s28, 1
      %p51 = por %p49, %p50
      %p53 = scmp.ne.s32.totalorder %s36, %s52
      %p54 = scmp.eq.s32.totalorder %s28, 0
      %p55 = por %p53, %p54
      %s57 = sadd.s32 %s56, 1
      %p60 = scmp.eq.s32.totalorder %s22, 1
      %p61 = scmp.ne.s32.totalorder %s56, %s58
      %p62 = scmp.eq.s32.totalorder %s22, 0
      %p63 = por %p61, %p62
      %p64 = scmp.ne.s32.totalorder %s56, %s58
      %p65 = scmp.eq.s32.totalorder %s27, 1
      %p66 = por %p64, %p65
      %p67 = scmp.ne.s32.totalorder %s58, %s59
      %p68 = scmp.eq.s32.totalorder %s27, 0
      %p69 = por %p67, %p68
      %p70 = scmp.ne.s32.totalorder %s58, %s59
      %p71 = scmp.eq.s32.totalorder %s28, 1
      %p72 = por %p70, %p71
      %p74 = scmp.ne.s32.totalorder %s59, %s73
      %p75 = scmp.eq.s32.totalorder %s28, 0
      %p76 = por %p74, %p75
      %s78 = sadd.s32 %s77, 1
      %p81 = scmp.eq.s32.totalorder %s22, 1
      %p82 = scmp.ne.s32.totalorder %s77, %s79
      %p83 = scmp.eq.s32.totalorder %s22, 0
      %p84 = por %p82, %p83
      %p85 = scmp.ne.s32.totalorder %s77, %s79
      %p86 = scmp.eq.s32.totalorder %s27, 1
      %p87 = por %p85, %p86
      %p88 = scmp.ne.s32.totalorder %s79, %s80
      %p89 = scmp.eq.s32.totalorder %s27, 0
      %p90 = por %p88, %p89
      %p91 = scmp.ne.s32.totalorder %s79, %s80
      %p92 = scmp.eq.s32.totalorder %s28, 1
      %p93 = por %p91, %p92
      %p95 = scmp.ne.s32.totalorder %s80, %s94
      %p96 = scmp.eq.s32.totalorder %s28, 0
      %p97 = por %p95, %p96
      %s99 = sadd.s32 %s98, 1
      %p102 = scmp.eq.s32.totalorder %s22, 1
      %p103 = scmp.ne.s32.totalorder %s98, %s100
      %p104 = scmp.eq.s32.totalorder %s22, 0
      %p105 = por %p103, %p104
      %p106 = scmp.ne.s32.totalorder %s98, %s100
      %p107 = scmp.eq.s32.totalorder %s27, 1
      %p108 = por %p106, %p107
      %p109 = scmp.ne.s32.totalorder %s100, %s101
      %p110 = scmp.eq.s32.totalorder %s27, 0
      %p111 = por %p109, %p110
      %p112 = scmp.ne.s32.totalorder %s100, %s101
      %p113 = scmp.eq.s32.totalorder %s28, 1
      %p114 = por %p112, %p113
      %p116 = scmp.ne.s32.totalorder %s101, %s115
      %p117 = scmp.eq.s32.totalorder %s28, 0
      %p118 = por %p116, %p117
      %s120 = sadd.s32 %s119, 1
      %p123 = scmp.eq.s32.totalorder %s22, 1
      %p124 = scmp.ne.s32.totalorder %s119, %s121
      %p125 = scmp.eq.s32.totalorder %s22, 0
      %p126 = por %p124, %p125
      %p127 = scmp.ne.s32.totalorder %s119, %s121
      %p128 = scmp.eq.s32.totalorder %s27, 1
      %p129 = por %p127, %p128
      %p130 = scmp.ne.s32.totalorder %s121, %s122
      %p131 = scmp.eq.s32.totalorder %s27, 0
      %p132 = por %p130, %p131
      %p133 = scmp.ne.s32.totalorder %s121, %s122
      %p134 = scmp.eq.s32.totalorder %s28, 1
      %p135 = por %p133, %p134
      %p137 = scmp.ne.s32.totalorder %s122, %s136
      %p138 = scmp.eq.s32.totalorder %s28, 0
      %p139 = por %p137, %p138
      %s141 = sadd.s32 %s140, 1
      %p144 = scmp.eq.s32.totalorder %s22, 1
      %p145 = scmp.ne.s32.totalorder %s140, %s142
      %p146 = scmp.eq.s32.totalorder %s22, 0
      %p147 = por %p145, %p146
      %p148 = scmp.ne.s32.totalorder %s140, %s142
      %p149 = scmp.eq.s32.totalorder %s27, 1
      %p150 = por %p148, %p149
      %p151 = scmp.ne.s32.totalorder %s142, %s143
      %p152 = scmp.eq.s32.totalorder %s27, 0
      %p153 = por %p151, %p152
      %p154 = scmp.ne.s32.totalorder %s142, %s143
      %p155 = scmp.eq.s32.totalorder %s28, 1
      %p156 = por %p154, %p155
      %p158 = scmp.ne.s32.totalorder %s143, %s157
      %p159 = scmp.eq.s32.totalorder %s28, 0
      %p160 = por %p158, %p159
      %s162 = sadd.s32 %s161, 1
      %p165 = scmp.eq.s32.totalorder %s22, 1
      %p166 = scmp.ne.s32.totalorder %s161, %s163
      %p167 = scmp.eq.s32.totalorder %s22, 0
      %p168 = por %p166, %p167
      %p169 = scmp.ne.s32.totalorder %s161, %s163
      %p170 = scmp.eq.s32.totalorder %s27, 1
      %p171 = por %p169, %p170
      %p172 = scmp.ne.s32.totalorder %s163, %s164
      %p173 = scmp.eq.s32.totalorder %s27, 0
      %p174 = por %p172, %p173
      %p175 = scmp.ne.s32.totalorder %s163, %s164
      %p176 = scmp.eq.s32.totalorder %s28, 1
      %p177 = por %p175, %p176
      %p179 = scmp.ne.s32.totalorder %s164, %s178
      %p180 = scmp.eq.s32.totalorder %s28, 0
      %p181 = por %p179, %p180
      %s183 = sadd.s32 %s182, 1
      %p186 = scmp.eq.s32.totalorder %s22, 1
      %p187 = scmp.ne.s32.totalorder %s182, %s184
      %p188 = scmp.eq.s32.totalorder %s22, 0
      %p189 = por %p187, %p188
      %p190 = scmp.ne.s32.totalorder %s182, %s184
      %p191 = scmp.eq.s32.totalorder %s27, 1
      %p192 = por %p190, %p191
      %p193 = scmp.ne.s32.totalorder %s184, %s185
      %p194 = scmp.eq.s32.totalorder %s27, 0
      %p195 = por %p193, %p194
      %p196 = scmp.ne.s32.totalorder %s184, %s185
      %p197 = scmp.eq.s32.totalorder %s28, 1
      %p198 = por %p196, %p197
      %p200 = scmp.ne.s32.totalorder %s185, %s199
      %p201 = scmp.eq.s32.totalorder %s28, 0
      %p202 = por %p200, %p201
      %s204 = sadd.s32 %s203, 1
      %p207 = scmp.eq.s32.totalorder %s22, 1
      %p208 = scmp.ne.s32.totalorder %s203, %s205
      %p209 = scmp.eq.s32.totalorder %s22, 0
      %p210 = por %p208, %p209
      %p211 = scmp.ne.s32.totalorder %s203, %s205
      %p212 = scmp.eq.s32.totalorder %s27, 1
      %p213 = por %p211, %p212
      %p214 = scmp.ne.s32.totalorder %s205, %s206
      %p215 = scmp.eq.s32.totalorder %s27, 0
      %p216 = por %p214, %p215
      %p217 = scmp.ne.s32.totalorder %s205, %s206
      %p218 = scmp.eq.s32.totalorder %s28, 1
      %p219 = por %p217, %p218
      %p221 = scmp.ne.s32.totalorder %s206, %s220
      %p222 = scmp.eq.s32.totalorder %s28, 0
      %p223 = por %p221, %p222
      %s225 = sadd.s32 %s224, 1
      %p228 = scmp.eq.s32.totalorder %s22, 1
      %p229 = scmp.ne.s32.totalorder %s224, %s226
      %p230 = scmp.eq.s32.totalorder %s22, 0
      %p231 = por %p229, %p230
      %p232 = scmp.ne.s32.totalorder %s224, %s226
      %p233 = scmp.eq.s32.totalorder %s27, 1
      %p234 = por %p232, %p233
      %p235 = scmp.ne.s32.totalorder %s226, %s227
      %p236 = scmp.eq.s32.totalorder %s27, 0
      %p237 = por %p235, %p236
      %p238 = scmp.ne.s32.totalorder %s226, %s227
      %p239 = scmp.eq.s32.totalorder %s28, 1
      %p240 = por %p238, %p239
      %p242 = scmp.ne.s32.totalorder %s227, %s241
      %p243 = scmp.eq.s32.totalorder %s28, 0
      %p244 = por %p242, %p243
      %s246 = sadd.s32 %s245, 1
      %p249 = scmp.eq.s32.totalorder %s22, 1
      %p250 = scmp.ne.s32.totalorder %s245, %s247
      %p251 = scmp.eq.s32.totalorder %s22, 0
      %p252 = por %p250, %p251
      %p253 = scmp.ne.s32.totalorder %s245, %s247
      %p254 = scmp.eq.s32.totalorder %s27, 1
      %p255 = por %p253, %p254
      %p256 = scmp.ne.s32.totalorder %s247, %s248
      %p257 = scmp.eq.s32.totalorder %s27, 0
      %p258 = por %p256, %p257
      %p259 = scmp.ne.s32.totalorder %s247, %s248
      %p260 = scmp.eq.s32.totalorder %s28, 1
      %p261 = por %p259, %p260
      %p263 = scmp.ne.s32.totalorder %s248, %s262
      %p264 = scmp.eq.s32.totalorder %s28, 0
      %p265 = por %p263, %p264
      %s267 = sadd.s32 %s266, 1
      %p270 = scmp.eq.s32.totalorder %s22, 1
      %p271 = scmp.ne.s32.totalorder %s266, %s268
      %p272 = scmp.eq.s32.totalorder %s22, 0
      %p273 = por %p271, %p272
      %p274 = scmp.ne.s32.totalorder %s266, %s268
      %p275 = scmp.eq.s32.totalorder %s27, 1
      %p276 = por %p274, %p275
      %p277 = scmp.ne.s32.totalorder %s268, %s269
      %p278 = scmp.eq.s32.totalorder %s27, 0
      %p279 = por %p277, %p278
      %p280 = scmp.ne.s32.totalorder %s268, %s269
      %p281 = scmp.eq.s32.totalorder %s28, 1
      %p282 = por %p280, %p281
      %p284 = scmp.ne.s32.totalorder %s269, %s283
      %p285 = scmp.eq.s32.totalorder %s28, 0
      %p286 = por %p284, %p285
      %s288 = sadd.s32 %s287, 1
      %p291 = scmp.eq.s32.totalorder %s22, 1
      %p292 = scmp.ne.s32.totalorder %s287, %s289
      %p293 = scmp.eq.s32.totalorder %s22, 0
      %p294 = por %p292, %p293
      %p295 = scmp.ne.s32.totalorder %s287, %s289
      %p296 = scmp.eq.s32.totalorder %s27, 1
      %p297 = por %p295, %p296
      %p298 = scmp.ne.s32.totalorder %s289, %s290
      %p299 = scmp.eq.s32.totalorder %s27, 0
      %p300 = por %p298, %p299
      %p301 = scmp.ne.s32.totalorder %s289, %s290
      %p302 = scmp.eq.s32.totalorder %s28, 1
      %p303 = por %p301, %p302
      %p305 = scmp.ne.s32.totalorder %s290, %s304
      %p306 = scmp.eq.s32.totalorder %s28, 0
      %p307 = por %p305, %p306
      %s308 = ssub.s32 %s22, %s29
      %p309 = scmp.eq.s32.totalorder %s308, 0
      %s311 = sadd.s32 %s310, 1
      %s312 = scalar_select %p309, %s310, %s311
      %p315 = pneg %p309
      %p316 = scmp.eq.s32.totalorder %s22, 1
      %p317 = por %p315, %p316
      %p318 = scmp.ne.s32.totalorder %s310, %s313
      %p319 = scmp.eq.s32.totalorder %s22, 0
      %p320 = por %p318, %p319
      %p321 = scmp.ne.s32.totalorder %s310, %s313
      %p322 = scmp.eq.s32.totalorder %s27, 1
      %p323 = por %p321, %p322
      %p324 = scmp.ne.s32.totalorder %s313, %s314
      %p325 = scmp.eq.s32.totalorder %s27, 0
      %p326 = por %p324, %p325
      %p327 = scmp.ne.s32.totalorder %s313, %s314
      %p328 = scmp.eq.s32.totalorder %s28, 1
      %p329 = por %p327, %p328
      %p331 = scmp.ne.s32.totalorder %s314, %s330
      %p332 = scmp.eq.s32.totalorder %s28, 0
      %p333 = por %p331, %p332
      %p334 = scmp.le.s32.totalorder 1, %s22
      %p335 = scmp.lt.s32.totalorder %s22, 3
      %p336 = pnand %p334, %p335
      %p337 = pneg %p336
      // Predicated region
      $region9: #{tpu_custom_call.1} parent=5 // pred_check
        _
      $region10: #{tpu_custom_call.1} parent=5 // pred_check_branch
        %339 = sbr.rel (%p336) target = $region12
      $region11: #{tpu_custom_call.1} parent=5 // pred_region
        %s340 = ssub.s32 %s22, 1
        // Predicated region
        $region13: #{tpu_custom_call.1} parent=11 // pred_check
          %p341 = pneg %p69
        $region14: #{tpu_custom_call.1} parent=11 // pred_check_branch
          %343 = sbr.rel (%p341) target = $region16
        $region15: #{tpu_custom_call.1} parent=11 // pred_region
          _
        $region16: #{tpu_custom_call.1} parent=11 // pred_fallthru
          _
        // Predicated region
        $region17: #{tpu_custom_call.1} parent=11 // pred_check
          %p344 = pneg %p90
        $region18: #{tpu_custom_call.1} parent=11 // pred_check_branch
          %346 = sbr.rel (%p344) target = $region20
        $region19: #{tpu_custom_call.1} parent=11 // pred_region
          _
        $region20: #{tpu_custom_call.1} parent=11 // pred_fallthru
          _
        // Predicated region
        $region21: #{tpu_custom_call.1} parent=11 // pred_check
          %p347 = pneg %p111
        $region22: #{tpu_custom_call.1} parent=11 // pred_check_branch
          %349 = sbr.rel (%p347) target = $region24
        $region23: #{tpu_custom_call.1} parent=11 // pred_region
          _
        $region24: #{tpu_custom_call.1} parent=11 // pred_fallthru
          _
        // Predicated region
        $region25: #{tpu_custom_call.1} parent=11 // pred_check
          %p350 = pneg %p132
        $region26: #{tpu_custom_call.1} parent=11 // pred_check_branch
          %352 = sbr.rel (%p350) target = $region28
        $region27: #{tpu_custom_call.1} parent=11 // pred_region
          _
        $region28: #{tpu_custom_call.1} parent=11 // pred_fallthru
          _
        // Predicated region
        $region29: #{tpu_custom_call.1} parent=11 // pred_check
          %p353 = pneg %p153
        $region30: #{tpu_custom_call.1} parent=11 // pred_check_branch
          %355 = sbr.rel (%p353) target = $region32
        $region31: #{tpu_custom_call.1} parent=11 // pred_region
          _
        $region32: #{tpu_custom_call.1} parent=11 // pred_fallthru
          _
        // Predicated region
        $region33: #{tpu_custom_call.1} parent=11 // pred_check
          %p356 = pneg %p174
        $region34: #{tpu_custom_call.1} parent=11 // pred_check_branch
          %358 = sbr.rel (%p356) target = $region36
        $region35: #{tpu_custom_call.1} parent=11 // pred_region
          _
        $region36: #{tpu_custom_call.1} parent=11 // pred_fallthru
          _
        // Predicated region
        $region37: #{tpu_custom_call.1} parent=11 // pred_check
          %p359 = pneg %p195
        $region38: #{tpu_custom_call.1} parent=11 // pred_check_branch
          %361 = sbr.rel (%p359) target = $region40
        $region39: #{tpu_custom_call.1} parent=11 // pred_region
          _
        $region40: #{tpu_custom_call.1} parent=11 // pred_fallthru
          _
        // Predicated region
        $region41: #{tpu_custom_call.1} parent=11 // pred_check
          %p362 = pneg %p216
        $region42: #{tpu_custom_call.1} parent=11 // pred_check_branch
          %364 = sbr.rel (%p362) target = $region44
        $region43: #{tpu_custom_call.1} parent=11 // pred_region
          _
        $region44: #{tpu_custom_call.1} parent=11 // pred_fallthru
          _
        // Predicated region
        $region45: #{tpu_custom_call.1} parent=11 // pred_check
          %p365 = pneg %p237
        $region46: #{tpu_custom_call.1} parent=11 // pred_check_branch
          %367 = sbr.rel (%p365) target = $region48
        $region47: #{tpu_custom_call.1} parent=11 // pred_region
          _
        $region48: #{tpu_custom_call.1} parent=11 // pred_fallthru
          _
        // Predicated region
        $region49: #{tpu_custom_call.1} parent=11 // pred_check
          %p368 = pneg %p258
        $region50: #{tpu_custom_call.1} parent=11 // pred_check_branch
          %370 = sbr.rel (%p368) target = $region52
        $region51: #{tpu_custom_call.1} parent=11 // pred_region
          _
        $region52: #{tpu_custom_call.1} parent=11 // pred_fallthru
          _
        // Predicated region
        $region53: #{tpu_custom_call.1} parent=11 // pred_check
          %p371 = pneg %p279
        $region54: #{tpu_custom_call.1} parent=11 // pred_check_branch
          %373 = sbr.rel (%p371) target = $region56
        $region55: #{tpu_custom_call.1} parent=11 // pred_region
          _
        $region56: #{tpu_custom_call.1} parent=11 // pred_fallthru
          _
        // Predicated region
        $region57: #{tpu_custom_call.1} parent=11 // pred_check
          %p374 = pneg %p300
        $region58: #{tpu_custom_call.1} parent=11 // pred_check_branch
          %376 = sbr.rel (%p374) target = $region60
        $region59: #{tpu_custom_call.1} parent=11 // pred_region
          _
        $region60: #{tpu_custom_call.1} parent=11 // pred_fallthru
          _
      $region12: #{tpu_custom_call.1} parent=5 // pred_fallthru
        _
      %p377 = scmp.lt.s32.totalorder %s22, 2
      // Predicated region
      $region61: #{tpu_custom_call.1} parent=5 // pred_check
        %p378 = pneg %p377
      $region62: #{tpu_custom_call.1} parent=5 // pred_check_branch
        %380 = sbr.rel (%p378) target = $region64
      $region63: #{tpu_custom_call.1} parent=5 // pred_region
        // Predicated region
        $region65: #{tpu_custom_call.1} parent=63 // pred_check
          %p381 = pneg %p42
        $region66: #{tpu_custom_call.1} parent=63 // pred_check_branch
          %383 = sbr.rel (%p381) target = $region68
        $region67: #{tpu_custom_call.1} parent=63 // pred_region
          %p384 = scmp.lt.s32.totalorder %s22, 1
          %s385 = scalar_select %p384, %s22, 1
          %s386 = smul.addr %s385, 2
          %s387 = smul.addr %s386, 4
          %s388 = scalar_lea.vmem %s0, %s387
        $region68: #{tpu_custom_call.1} parent=63 // pred_fallthru
          _
      $region64: #{tpu_custom_call.1} parent=5 // pred_fallthru
        _
      %p389 = scmp.le.s32.totalorder 1, %s22
      %p390 = scmp.lt.s32.totalorder %s22, 3
      %p391 = pnand %p389, %p390
      %p392 = pneg %p391
      // Predicated region
      $region69: #{tpu_custom_call.1} parent=5 // pred_check
        _
      $region70: #{tpu_custom_call.1} parent=5 // pred_check_branch
        %394 = sbr.rel (%p391) target = $region72
      $region71: #{tpu_custom_call.1} parent=5 // pred_region
        %s395 = ssub.s32 %s22, 1
        %p396 = scmp.lt.s32.totalorder %s27, 1
        %s397 = scalar_select %p396, %s27, 1
        %s398 = smul.addr %s397, 2
        %s399 = smul.addr %s398, 4
        %s400 = scalar_lea.vmem %s0, %s399
        %p401 = pneg %p48
        %p402 = pneg %p45
        %p403 = pneg %p69
        %p404 = pneg %p66
        %p405 = pneg %p90
        %p406 = pneg %p87
        %p407 = pneg %p111
        %p408 = pneg %p108
        %p409 = pneg %p132
        %p410 = pneg %p129
        %p411 = pneg %p153
        %p412 = pneg %p150
        %p413 = pneg %p174
        %p414 = pneg %p171
        %p415 = pneg %p195
        %p416 = pneg %p192
        %p417 = pneg %p216
        %p418 = pneg %p213
        %p419 = pneg %p237
        %p420 = pneg %p234
        %p421 = pneg %p258
        %p422 = pneg %p255
        %p423 = pneg %p279
        %p424 = pneg %p276
        %p425 = pneg %p300
        %p426 = pneg %p297
        %p427 = pneg %p326
        %p428 = pneg %p323
        %s429 = sand.u32 %s313, 1
        %s430 = scalar_lea.sflag [#allocation3], %s429
        %s431 = sand.u32 %s313, 1
        %s432 = smul.addr %s431, 8
        %s433 = scalar_lea.vmem [#allocation2], %s432
        %p434 = scmp.lt.s32.totalorder %s27, 1
        %s435 = scalar_select %p434, %s27, 1
        %s436 = smul.addr %s435, 2
        %s437 = smul.addr %s436, 4
        %s438 = scalar_lea.vmem %s0, %s437
        %v439 = vld [vmem:[%s438] sm:$0xff]
        %v441 = vcombine.high %v439, %v439
        %443 = vrot.lane.b32.xlu0 %v439, 17
        %v444 = vpop.permute.xlu0 %443
        %445 = vrot.lane.b32.xlu0 %v441, 17
        %v446 = vpop.permute.xlu0 %445
        %v447 = vlaneseq
        %v448 = vand.u32 %v447, 127
        %vm449 = vcmp.lt.s32.totalorder %v448, 17
        %v450 = vsel %vm449, %v444, %v446
        %v451 = vsel %vm449, %v446, %v444
        %v452 = vld [vmem:[%s1] sm:$0x3]
        %v454 = vlaneseq
        %v455 = vshrl.u32 %v454, 7
        %v456 = vsub.s32 0, %v455
        %v457 = vrot.slane %v452, %v456
        %v458 = vlaneseq
        %v459 = vshrl.u32 %v458, 7
        %v460 = vsub.s32 1, %v459
        %v461 = vrot.slane %v452, %v460
        %v464 = vmul.f32 %v451, %v457
        %v465 = vmul.f32 %v450, %v461
        %v466 = vld [vmem:[%s2] sm:$0xf]
        %467 = vrot.lane.b32.xlu0 %v439, 16
        %v468 = vpop.permute.xlu0 %467
        %469 = vrot.lane.b32.xlu0 %v441, 16
        %v470 = vpop.permute.xlu0 %469
        %vm471 = vcmp.lt.s32.totalorder %v448, 16
        %v472 = vsel %vm471, %v468, %v470
        %v473 = vsel %vm471, %v470, %v468
        %s474 = scalar_lea.vmem %s1, 2
        %v475 = vld [vmem:[%s474] sm:$0x3]
        %v477 = vlaneseq
        %v478 = vshrl.u32 %v477, 7
        %v479 = vsub.s32 0, %v478
        %v480 = vrot.slane %v475, %v479
        %v481 = vlaneseq
        %v482 = vshrl.u32 %v481, 7
        %v483 = vsub.s32 1, %v482
        %v484 = vrot.slane %v475, %v483
        %v487 = vmul.f32 %v473, %v480
        %v488 = vmul.f32 %v472, %v484
        %s489 = scalar_lea.vmem %s2, 4
        %v490 = vld [vmem:[%s489] sm:$0xf]
        %vm491 = vcmask 31744
        %v493 = vsel %vm491, %v490, 0
        %vm495 = vcmask 1043456
        %v497 = vsel %vm495, %v487, 0
        %v500 = vsel %vm495, %v488, 0
        %502 = vmatprep.subr.mxu0 %v500
        %503 = vmatpush1.msra.mxu0 %v497
        %504 = vmatprep.subr.mxu0 0.0
        %505 = vmatpush1.msra.mxu0 0.0
        %506 = vmatprep.subr.mxu0 0.0
        %507 = vmatpush1.msra.mxu0 0.0
        %508 = vmatprep.subr.mxu0 0.0
        %509 = vmatpush1.msra.mxu0 0.0
        %510 = vmatprep.subr.mxu0 0.0
        %511 = vmatpush1.msra.mxu0 0.0
        %512 = vmatprep.subr.mxu0 0.0
        %513 = vmatpush1.msra.mxu0 0.0
        %514 = vmatprep.subr.mxu0 0.0
        %515 = vmatpush1.msra.mxu0 0.0
        %516 = vmatprep.subr.mxu0 0.0
        %517 = vmatpush1.msra.mxu0 0.0
        %518 = vmatprep.subr.mxu0 0.0
        %519 = vmatpush1.msra.mxu0 0.0
        %520 = vmatprep.subr.mxu0 0.0
        %521 = vmatpush1.msra.mxu0 0.0
        %522 = vmatprep.subr.mxu0 0.0
        %523 = vmatpush1.msra.mxu0 0.0
        %524 = vmatprep.subr.mxu0 0.0
        %525 = vmatpush1.msra.mxu0 0.0
        %526 = vmatprep.subr.mxu0 0.0
        %527 = vmatpush1.msra.mxu0 0.0
        %528 = vmatprep.subr.mxu0 0.0
        %529 = vmatpush1.msra.mxu0 0.0
        %530 = vmatprep.subr.mxu0 0.0
        %531 = vmatpush1.msra.mxu0 0.0
        %532 = vmatprep.subr.mxu0 0.0
        %533 = vmatpush1.msra.mxu0 0.0
        %534 = vmatprep.subr.mxu0 0.0
        %535 = vmatpush1.msra.mxu0 0.0
        %536 = vmatprep.subr.mxu0 0.0
        %537 = vmatpush1.msra.mxu0 0.0
        %538 = vmatprep.subr.mxu0 0.0
        %539 = vmatpush1.msra.mxu0 0.0
        %540 = vmatprep.subr.mxu0 0.0
        %541 = vmatpush1.msra.mxu0 0.0
        %542 = vmatprep.subr.mxu0 0.0
        %543 = vmatpush1.msra.mxu0 0.0
        %544 = vmatprep.subr.mxu0 0.0
        %545 = vmatpush1.msra.mxu0 0.0
        %546 = vmatprep.subr.mxu0 0.0
        %547 = vmatpush1.msra.mxu0 0.0
        %548 = vmatprep.subr.mxu0 0.0
        %549 = vmatpush1.msra.mxu0 0.0
        %550 = vmatprep.subr.mxu0 0.0
        %551 = vmatpush1.msra.mxu0 0.0
        %552 = vmatprep.subr.mxu0 0.0
        %553 = vmatpush1.msra.mxu0 0.0
        %554 = vmatprep.subr.mxu0 0.0
        %555 = vmatpush1.msra.mxu0 0.0
        %556 = vmatprep.subr.mxu0 0.0
        %557 = vmatpush1.msra.mxu0 0.0
        %558 = vmatprep.subr.mxu0 0.0
        %559 = vmatpush1.msra.mxu0 0.0
        %560 = vmatprep.subr.mxu0 0.0
        %561 = vmatpush1.msra.mxu0 0.0
        %562 = vmatprep.subr.mxu0 0.0
        %563 = vmatpush1.msra.mxu0 0.0
        %564 = vmatprep.subr.mxu0 0.0
        %565 = vmatpush1.msra.mxu0 0.0
        %566 = vmatprep.mubr.f32.mxu0 0.0
        %567 = vmatmul.mubr.f32.gmra.mrb[0].mxu0 %v493
        %v568 = vpop.f32.mrb[0].mxu0
        %v569 = vadd.f32 0.0, %v568
        %v570 = vpop.f32.mrb[0].mxu0
        %v571 = vadd.f32 0.0, %v570
        %572 = vdwg.mxu0
        %v574 = vsel %vm491, %v466, 0
        %v577 = vsel %vm495, %v464, 0
        %v580 = vsel %vm495, %v465, 0
        %582 = vmatprep.subr.mxu0 %v580
        %583 = vmatpush1.msra.mxu0 %v577
        %584 = vmatprep.subr.mxu0 0.0
        %585 = vmatpush1.msra.mxu0 0.0
        %586 = vmatprep.subr.mxu0 0.0
        %587 = vmatpush1.msra.mxu0 0.0
        %588 = vmatprep.subr.mxu0 0.0
        %589 = vmatpush1.msra.mxu0 0.0
        %590 = vmatprep.subr.mxu0 0.0
        %591 = vmatpush1.msra.mxu0 0.0
        %592 = vmatprep.subr.mxu0 0.0
        %593 = vmatpush1.msra.mxu0 0.0
        %594 = vmatprep.subr.mxu0 0.0
        %595 = vmatpush1.msra.mxu0 0.0
        %596 = vmatprep.subr.mxu0 0.0
        %597 = vmatpush1.msra.mxu0 0.0
        %598 = vmatprep.subr.mxu0 0.0
        %599 = vmatpush1.msra.mxu0 0.0
        %600 = vmatprep.subr.mxu0 0.0
        %601 = vmatpush1.msra.mxu0 0.0
        %602 = vmatprep.subr.mxu0 0.0
        %603 = vmatpush1.msra.mxu0 0.0
        %604 = vmatprep.subr.mxu0 0.0
        %605 = vmatpush1.msra.mxu0 0.0
        %606 = vmatprep.subr.mxu0 0.0
        %607 = vmatpush1.msra.mxu0 0.0
        %608 = vmatprep.subr.mxu0 0.0
        %609 = vmatpush1.msra.mxu0 0.0
        %610 = vmatprep.subr.mxu0 0.0
        %611 = vmatpush1.msra.mxu0 0.0
        %612 = vmatprep.subr.mxu0 0.0
        %613 = vmatpush1.msra.mxu0 0.0
        %614 = vmatprep.subr.mxu0 0.0
        %615 = vmatpush1.msra.mxu0 0.0
        %616 = vmatprep.subr.mxu0 0.0
        %617 = vmatpush1.msra.mxu0 0.0
        %618 = vmatprep.subr.mxu0 0.0
        %619 = vmatpush1.msra.mxu0 0.0
        %620 = vmatprep.subr.mxu0 0.0
        %621 = vmatpush1.msra.mxu0 0.0
        %622 = vmatprep.subr.mxu0 0.0
        %623 = vmatpush1.msra.mxu0 0.0
        %624 = vmatprep.subr.mxu0 0.0
        %625 = vmatpush1.msra.mxu0 0.0
        %626 = vmatprep.subr.mxu0 0.0
        %627 = vmatpush1.msra.mxu0 0.0
        %628 = vmatprep.subr.mxu0 0.0
        %629 = vmatpush1.msra.mxu0 0.0
        %630 = vmatprep.subr.mxu0 0.0
        %631 = vmatpush1.msra.mxu0 0.0
        %632 = vmatprep.subr.mxu0 0.0
        %633 = vmatpush1.msra.mxu0 0.0
        %634 = vmatprep.subr.mxu0 0.0
        %635 = vmatpush1.msra.mxu0 0.0
        %636 = vmatprep.subr.mxu0 0.0
        %637 = vmatpush1.msra.mxu0 0.0
        %638 = vmatprep.subr.mxu0 0.0
        %639 = vmatpush1.msra.mxu0 0.0
        %640 = vmatprep.subr.mxu0 0.0
        %641 = vmatpush1.msra.mxu0 0.0
        %642 = vmatprep.subr.mxu0 0.0
        %643 = vmatpush1.msra.mxu0 0.0
        %644 = vmatprep.subr.mxu0 0.0
        %645 = vmatpush1.msra.mxu0 0.0
        %646 = vmatprep.mubr.f32.mxu0 0.0
        %647 = vmatmul.mubr.f32.gmra.mrb[0].mxu0 %v574
        %v648 = vpop.f32.mrb[0].mxu0
        %v649 = vadd.f32 %v569, %v648
        %v650 = vpop.f32.mrb[0].mxu0
        %v651 = vadd.f32 %v571, %v650
        %652 = vdwg.mxu0
        %653 = vrot.lane.b32.xlu0 %v439, 15
        %v654 = vpop.permute.xlu0 %653
        %655 = vrot.lane.b32.xlu0 %v441, 15
        %v656 = vpop.permute.xlu0 %655
        %vm657 = vcmp.lt.s32.totalorder %v448, 15
        %v658 = vsel %vm657, %v654, %v656
        %v659 = vsel %vm657, %v656, %v654
        %s660 = scalar_lea.vmem %s1, 4
        %v661 = vld [vmem:[%s660] sm:$0x3]
        %v663 = vlaneseq
        %v664 = vshrl.u32 %v663, 7
        %v665 = vsub.s32 0, %v664
        %v666 = vrot.slane %v661, %v665
        %v667 = vlaneseq
        %v668 = vshrl.u32 %v667, 7
        %v669 = vsub.s32 1, %v668
        %v670 = vrot.slane %v661, %v669
        %v673 = vmul.f32 %v659, %v666
        %v674 = vmul.f32 %v658, %v670
        %s675 = scalar_lea.vmem %s2, 8
        %v676 = vld [vmem:[%s675] sm:$0xf]
        %v678 = vsel %vm491, %v676, 0
        %v681 = vsel %vm495, %v673, 0
        %v684 = vsel %vm495, %v674, 0
        %686 = vmatprep.subr.mxu0 %v684
        %687 = vmatpush1.msra.mxu0 %v681
        %688 = vmatprep.subr.mxu0 0.0
        %689 = vmatpush1.msra.mxu0 0.0
        %690 = vmatprep.subr.mxu0 0.0
        %691 = vmatpush1.msra.mxu0 0.0
        %692 = vmatprep.subr.mxu0 0.0
        %693 = vmatpush1.msra.mxu0 0.0
        %694 = vmatprep.subr.mxu0 0.0
        %695 = vmatpush1.msra.mxu0 0.0
        %696 = vmatprep.subr.mxu0 0.0
        %697 = vmatpush1.msra.mxu0 0.0
        %698 = vmatprep.subr.mxu0 0.0
        %699 = vmatpush1.msra.mxu0 0.0
        %700 = vmatprep.subr.mxu0 0.0
        %701 = vmatpush1.msra.mxu0 0.0
        %702 = vmatprep.subr.mxu0 0.0
        %703 = vmatpush1.msra.mxu0 0.0
        %704 = vmatprep.subr.mxu0 0.0
        %705 = vmatpush1.msra.mxu0 0.0
        %706 = vmatprep.subr.mxu0 0.0
        %707 = vmatpush1.msra.mxu0 0.0
        %708 = vmatprep.subr.mxu0 0.0
        %709 = vmatpush1.msra.mxu0 0.0
        %710 = vmatprep.subr.mxu0 0.0
        %711 = vmatpush1.msra.mxu0 0.0
        %712 = vmatprep.subr.mxu0 0.0
        %713 = vmatpush1.msra.mxu0 0.0
        %714 = vmatprep.subr.mxu0 0.0
        %715 = vmatpush1.msra.mxu0 0.0
        %716 = vmatprep.subr.mxu0 0.0
        %717 = vmatpush1.msra.mxu0 0.0
        %718 = vmatprep.subr.mxu0 0.0
        %719 = vmatpush1.msra.mxu0 0.0
        %720 = vmatprep.subr.mxu0 0.0
        %721 = vmatpush1.msra.mxu0 0.0
        %722 = vmatprep.subr.mxu0 0.0
        %723 = vmatpush1.msra.mxu0 0.0
        %724 = vmatprep.subr.mxu0 0.0
        %725 = vmatpush1.msra.mxu0 0.0
        %726 = vmatprep.subr.mxu0 0.0
        %727 = vmatpush1.msra.mxu0 0.0
        %728 = vmatprep.subr.mxu0 0.0
        %729 = vmatpush1.msra.mxu0 0.0
        %730 = vmatprep.subr.mxu0 0.0
        %731 = vmatpush1.msra.mxu0 0.0
        %732 = vmatprep.subr.mxu0 0.0
        %733 = vmatpush1.msra.mxu0 0.0
        %734 = vmatprep.subr.mxu0 0.0
        %735 = vmatpush1.msra.mxu0 0.0
        %736 = vmatprep.subr.mxu0 0.0
        %737 = vmatpush1.msra.mxu0 0.0
        %738 = vmatprep.subr.mxu0 0.0
        %739 = vmatpush1.msra.mxu0 0.0
        %740 = vmatprep.subr.mxu0 0.0
        %741 = vmatpush1.msra.mxu0 0.0
        %742 = vmatprep.subr.mxu0 0.0
        %743 = vmatpush1.msra.mxu0 0.0
        %744 = vmatprep.subr.mxu0 0.0
        %745 = vmatpush1.msra.mxu0 0.0
        %746 = vmatprep.subr.mxu0 0.0
        %747 = vmatpush1.msra.mxu0 0.0
        %748 = vmatprep.subr.mxu0 0.0
        %749 = vmatpush1.msra.mxu0 0.0
        %750 = vmatprep.mubr.f32.mxu0 0.0
        %751 = vmatmul.mubr.f32.gmra.mrb[0].mxu0 %v678
        %v752 = vpop.f32.mrb[0].mxu0
        %v753 = vadd.f32 0.0, %v752
        %v754 = vpop.f32.mrb[0].mxu0
        %v755 = vadd.f32 0.0, %v754
        %756 = vdwg.mxu0
        %v757 = vadd.f32 %v649, %v753
        %v758 = vadd.f32 %v651, %v755
        %759 = vrot.lane.b32.xlu0 %v439, 1
        %v760 = vpop.permute.xlu0 %759
        %761 = vrot.lane.b32.xlu0 %v441, 1
        %v762 = vpop.permute.xlu0 %761
        %vm763 = vcmp.lt.s32.totalorder %v448, 1
        %v764 = vsel %vm763, %v760, %v762
        %v765 = vsel %vm763, %v762, %v760
        %s766 = scalar_lea.vmem %s1, 6
        %v767 = vld [vmem:[%s766] sm:$0x3]
        %v769 = vlaneseq
        %v770 = vshrl.u32 %v769, 7
        %v771 = vsub.s32 0, %v770
        %v772 = vrot.slane %v767, %v771
        %v773 = vlaneseq
        %v774 = vshrl.u32 %v773, 7
        %v775 = vsub.s32 1, %v774
        %v776 = vrot.slane %v767, %v775
        %v779 = vmul.f32 %v765, %v772
        %v780 = vmul.f32 %v764, %v776
        %s781 = scalar_lea.vmem %s2, 12
        %v782 = vld [vmem:[%s781] sm:$0xf]
        %v784 = vsel %vm491, %v782, 0
        %v787 = vsel %vm495, %v779, 0
        %v790 = vsel %vm495, %v780, 0
        %792 = vmatprep.subr.mxu0 %v790
        %793 = vmatpush1.msra.mxu0 %v787
        %794 = vmatprep.subr.mxu0 0.0
        %795 = vmatpush1.msra.mxu0 0.0
        %796 = vmatprep.subr.mxu0 0.0
        %797 = vmatpush1.msra.mxu0 0.0
        %798 = vmatprep.subr.mxu0 0.0
        %799 = vmatpush1.msra.mxu0 0.0
        %800 = vmatprep.subr.mxu0 0.0
        %801 = vmatpush1.msra.mxu0 0.0
        %802 = vmatprep.subr.mxu0 0.0
        %803 = vmatpush1.msra.mxu0 0.0
        %804 = vmatprep.subr.mxu0 0.0
        %805 = vmatpush1.msra.mxu0 0.0
        %806 = vmatprep.subr.mxu0 0.0
        %807 = vmatpush1.msra.mxu0 0.0
        %808 = vmatprep.subr.mxu0 0.0
        %809 = vmatpush1.msra.mxu0 0.0
        %810 = vmatprep.subr.mxu0 0.0
        %811 = vmatpush1.msra.mxu0 0.0
        %812 = vmatprep.subr.mxu0 0.0
        %813 = vmatpush1.msra.mxu0 0.0
        %814 = vmatprep.subr.mxu0 0.0
        %815 = vmatpush1.msra.mxu0 0.0
        %816 = vmatprep.subr.mxu0 0.0
        %817 = vmatpush1.msra.mxu0 0.0
        %818 = vmatprep.subr.mxu0 0.0
        %819 = vmatpush1.msra.mxu0 0.0
        %820 = vmatprep.subr.mxu0 0.0
        %821 = vmatpush1.msra.mxu0 0.0
        %822 = vmatprep.subr.mxu0 0.0
        %823 = vmatpush1.msra.mxu0 0.0
        %824 = vmatprep.subr.mxu0 0.0
        %825 = vmatpush1.msra.mxu0 0.0
        %826 = vmatprep.subr.mxu0 0.0
        %827 = vmatpush1.msra.mxu0 0.0
        %828 = vmatprep.subr.mxu0 0.0
        %829 = vmatpush1.msra.mxu0 0.0
        %830 = vmatprep.subr.mxu0 0.0
        %831 = vmatpush1.msra.mxu0 0.0
        %832 = vmatprep.subr.mxu0 0.0
        %833 = vmatpush1.msra.mxu0 0.0
        %834 = vmatprep.subr.mxu0 0.0
        %835 = vmatpush1.msra.mxu0 0.0
        %836 = vmatprep.subr.mxu0 0.0
        %837 = vmatpush1.msra.mxu0 0.0
        %838 = vmatprep.subr.mxu0 0.0
        %839 = vmatpush1.msra.mxu0 0.0
        %840 = vmatprep.subr.mxu0 0.0
        %841 = vmatpush1.msra.mxu0 0.0
        %842 = vmatprep.subr.mxu0 0.0
        %843 = vmatpush1.msra.mxu0 0.0
        %844 = vmatprep.subr.mxu0 0.0
        %845 = vmatpush1.msra.mxu0 0.0
        %846 = vmatprep.subr.mxu0 0.0
        %847 = vmatpush1.msra.mxu0 0.0
        %848 = vmatprep.subr.mxu0 0.0
        %849 = vmatpush1.msra.mxu0 0.0
        %850 = vmatprep.subr.mxu0 0.0
        %851 = vmatpush1.msra.mxu0 0.0
        %852 = vmatprep.subr.mxu0 0.0
        %853 = vmatpush1.msra.mxu0 0.0
        %854 = vmatprep.subr.mxu0 0.0
        %855 = vmatpush1.msra.mxu0 0.0
        %856 = vmatprep.mubr.f32.mxu0 0.0
        %857 = vmatmul.mubr.f32.gmra.mrb[0].mxu0 %v784
        %v858 = vpop.f32.mrb[0].mxu0
        %v859 = vadd.f32 0.0, %v858
        %v860 = vpop.f32.mrb[0].mxu0
        %v861 = vadd.f32 0.0, %v860
        %862 = vdwg.mxu0
        %v863 = vadd.f32 %v757, %v859
        %v864 = vadd.f32 %v758, %v861
        %s865 = scalar_lea.vmem %s2, 16
        %v866 = vld [vmem:[%s865] sm:$0xf]
        %v868 = vsel %vm491, %v866, 0
        %v870 = vsel %vm495, %v439, 0
        %v872 = vsel %vm495, %v441, 0
        %874 = vmatprep.subr.mxu0 %v872
        %875 = vmatpush1.msra.mxu0 %v870
        %876 = vmatprep.subr.mxu0 0.0
        %877 = vmatpush1.msra.mxu0 0.0
        %878 = vmatprep.subr.mxu0 0.0
        %879 = vmatpush1.msra.mxu0 0.0
        %880 = vmatprep.subr.mxu0 0.0
        %881 = vmatpush1.msra.mxu0 0.0
        %882 = vmatprep.subr.mxu0 0.0
        %883 = vmatpush1.msra.mxu0 0.0
        %884 = vmatprep.subr.mxu0 0.0
        %885 = vmatpush1.msra.mxu0 0.0
        %886 = vmatprep.subr.mxu0 0.0
        %887 = vmatpush1.msra.mxu0 0.0
        %888 = vmatprep.subr.mxu0 0.0
        %889 = vmatpush1.msra.mxu0 0.0
        %890 = vmatprep.subr.mxu0 0.0
        %891 = vmatpush1.msra.mxu0 0.0
        %892 = vmatprep.subr.mxu0 0.0
        %893 = vmatpush1.msra.mxu0 0.0
        %894 = vmatprep.subr.mxu0 0.0
        %895 = vmatpush1.msra.mxu0 0.0
        %896 = vmatprep.subr.mxu0 0.0
        %897 = vmatpush1.msra.mxu0 0.0
        %898 = vmatprep.subr.mxu0 0.0
        %899 = vmatpush1.msra.mxu0 0.0
        %900 = vmatprep.subr.mxu0 0.0
        %901 = vmatpush1.msra.mxu0 0.0
        %902 = vmatprep.subr.mxu0 0.0
        %903 = vmatpush1.msra.mxu0 0.0
        %904 = vmatprep.subr.mxu0 0.0
        %905 = vmatpush1.msra.mxu0 0.0
        %906 = vmatprep.subr.mxu0 0.0
        %907 = vmatpush1.msra.mxu0 0.0
        %908 = vmatprep.subr.mxu0 0.0
        %909 = vmatpush1.msra.mxu0 0.0
        %910 = vmatprep.subr.mxu0 0.0
        %911 = vmatpush1.msra.mxu0 0.0
        %912 = vmatprep.subr.mxu0 0.0
        %913 = vmatpush1.msra.mxu0 0.0
        %914 = vmatprep.subr.mxu0 0.0
        %915 = vmatpush1.msra.mxu0 0.0
        %916 = vmatprep.subr.mxu0 0.0
        %917 = vmatpush1.msra.mxu0 0.0
        %918 = vmatprep.subr.mxu0 0.0
        %919 = vmatpush1.msra.mxu0 0.0
        %920 = vmatprep.subr.mxu0 0.0
        %921 = vmatpush1.msra.mxu0 0.0
        %922 = vmatprep.subr.mxu0 0.0
        %923 = vmatpush1.msra.mxu0 0.0
        %924 = vmatprep.subr.mxu0 0.0
        %925 = vmatpush1.msra.mxu0 0.0
        %926 = vmatprep.subr.mxu0 0.0
        %927 = vmatpush1.msra.mxu0 0.0
        %928 = vmatprep.subr.mxu0 0.0
        %929 = vmatpush1.msra.mxu0 0.0
        %930 = vmatprep.subr.mxu0 0.0
        %931 = vmatpush1.msra.mxu0 0.0
        %932 = vmatprep.subr.mxu0 0.0
        %933 = vmatpush1.msra.mxu0 0.0
        %934 = vmatprep.subr.mxu0 0.0
        %935 = vmatpush1.msra.mxu0 0.0
        %936 = vmatprep.subr.mxu0 0.0
        %937 = vmatpush1.msra.mxu0 0.0
        %938 = vmatprep.mubr.f32.mxu0 0.0
        %939 = vmatmul.mubr.f32.gmra.mrb[0].mxu0 %v868
        %v940 = vpop.f32.mrb[0].mxu0
        %v941 = vadd.f32 0.0, %v940
        %v942 = vpop.f32.mrb[0].mxu0
        %v943 = vadd.f32 0.0, %v942
        %944 = vdwg.mxu0
        %v945 = vadd.f32 %v863, %v941
        %v946 = vadd.f32 %v864, %v943
        %947 = vrot.lane.b32.xlu0 %v439, 127
        %v948 = vpop.permute.xlu0 %947
        %949 = vrot.lane.b32.xlu0 %v441, 127
        %v950 = vpop.permute.xlu0 %949
        %vm951 = vcmp.lt.s32.totalorder %v448, 127
        %v952 = vsel %vm951, %v948, %v950
        %v953 = vsel %vm951, %v950, %v948
        %s954 = scalar_lea.vmem %s1, 10
        %v955 = vld [vmem:[%s954] sm:$0x3]
        %v957 = vlaneseq
        %v958 = vshrl.u32 %v957, 7
        %v959 = vsub.s32 0, %v958
        %v960 = vrot.slane %v955, %v959
        %v961 = vlaneseq
        %v962 = vshrl.u32 %v961, 7
        %v963 = vsub.s32 1, %v962
        %v964 = vrot.slane %v955, %v963
        %v967 = vmul.f32 %v952, %v960
        %v968 = vmul.f32 %v953, %v964
        %s969 = scalar_lea.vmem %s2, 20
        %v970 = vld [vmem:[%s969] sm:$0xf]
        %v972 = vsel %vm491, %v970, 0
        %v975 = vsel %vm495, %v967, 0
        %v978 = vsel %vm495, %v968, 0
        %980 = vmatprep.subr.mxu0 %v978
        %981 = vmatpush1.msra.mxu0 %v975
        %982 = vmatprep.subr.mxu0 0.0
        %983 = vmatpush1.msra.mxu0 0.0
        %984 = vmatprep.subr.mxu0 0.0
        %985 = vmatpush1.msra.mxu0 0.0
        %986 = vmatprep.subr.mxu0 0.0
        %987 = vmatpush1.msra.mxu0 0.0
        %988 = vmatprep.subr.mxu0 0.0
        %989 = vmatpush1.msra.mxu0 0.0
        %990 = vmatprep.subr.mxu0 0.0
        %991 = vmatpush1.msra.mxu0 0.0
        %992 = vmatprep.subr.mxu0 0.0
        %993 = vmatpush1.msra.mxu0 0.0
        %994 = vmatprep.subr.mxu0 0.0
        %995 = vmatpush1.msra.mxu0 0.0
        %996 = vmatprep.subr.mxu0 0.0
        %997 = vmatpush1.msra.mxu0 0.0
        %998 = vmatprep.subr.mxu0 0.0
        %999 = vmatpush1.msra.mxu0 0.0
        %1000 = vmatprep.subr.mxu0 0.0
        %1001 = vmatpush1.msra.mxu0 0.0
        %1002 = vmatprep.subr.mxu0 0.0
        %1003 = vmatpush1.msra.mxu0 0.0
        %1004 = vmatprep.subr.mxu0 0.0
        %1005 = vmatpush1.msra.mxu0 0.0
        %1006 = vmatprep.subr.mxu0 0.0
        %1007 = vmatpush1.msra.mxu0 0.0
        %1008 = vmatprep.subr.mxu0 0.0
        %1009 = vmatpush1.msra.mxu0 0.0
        %1010 = vmatprep.subr.mxu0 0.0
        %1011 = vmatpush1.msra.mxu0 0.0
        %1012 = vmatprep.subr.mxu0 0.0
        %1013 = vmatpush1.msra.mxu0 0.0
        %1014 = vmatprep.subr.mxu0 0.0
        %1015 = vmatpush1.msra.mxu0 0.0
        %1016 = vmatprep.subr.mxu0 0.0
        %1017 = vmatpush1.msra.mxu0 0.0
        %1018 = vmatprep.subr.mxu0 0.0
        %1019 = vmatpush1.msra.mxu0 0.0
        %1020 = vmatprep.subr.mxu0 0.0
        %1021 = vmatpush1.msra.mxu0 0.0
        %1022 = vmatprep.subr.mxu0 0.0
        %1023 = vmatpush1.msra.mxu0 0.0
        %1024 = vmatprep.subr.mxu0 0.0
        %1025 = vmatpush1.msra.mxu0 0.0
        %1026 = vmatprep.subr.mxu0 0.0
        %1027 = vmatpush1.msra.mxu0 0.0
        %1028 = vmatprep.subr.mxu0 0.0
        %1029 = vmatpush1.msra.mxu0 0.0
        %1030 = vmatprep.subr.mxu0 0.0
        %1031 = vmatpush1.msra.mxu0 0.0
        %1032 = vmatprep.subr.mxu0 0.0
        %1033 = vmatpush1.msra.mxu0 0.0
        %1034 = vmatprep.subr.mxu0 0.0
        %1035 = vmatpush1.msra.mxu0 0.0
        %1036 = vmatprep.subr.mxu0 0.0
        %1037 = vmatpush1.msra.mxu0 0.0
        %1038 = vmatprep.subr.mxu0 0.0
        %1039 = vmatpush1.msra.mxu0 0.0
        %1040 = vmatprep.subr.mxu0 0.0
        %1041 = vmatpush1.msra.mxu0 0.0
        %1042 = vmatprep.subr.mxu0 0.0
        %1043 = vmatpush1.msra.mxu0 0.0
        %1044 = vmatprep.mubr.f32.mxu0 0.0
        %1045 = vmatmul.mubr.f32.gmra.mrb[0].mxu0 %v972
        %v1046 = vpop.f32.mrb[0].mxu0
        %v1047 = vadd.f32 0.0, %v1046
        %v1048 = vpop.f32.mrb[0].mxu0
        %v1049 = vadd.f32 0.0, %v1048
        %1050 = vdwg.mxu0
        %v1051 = vadd.f32 %v945, %v1047
        %v1052 = vadd.f32 %v946, %v1049
        %1053 = vrot.lane.b32.xlu0 %v439, 113
        %v1054 = vpop.permute.xlu0 %1053
        %1055 = vrot.lane.b32.xlu0 %v441, 113
        %v1056 = vpop.permute.xlu0 %1055
        %vm1057 = vcmp.lt.s32.totalorder %v448, 113
        %v1058 = vsel %vm1057, %v1054, %v1056
        %v1059 = vsel %vm1057, %v1056, %v1054
        %s1060 = scalar_lea.vmem %s1, 12
        %v1061 = vld [vmem:[%s1060] sm:$0x3]
        %v1063 = vlaneseq
        %v1064 = vshrl.u32 %v1063, 7
        %v1065 = vsub.s32 0, %v1064
        %v1066 = vrot.slane %v1061, %v1065
        %v1067 = vlaneseq
        %v1068 = vshrl.u32 %v1067, 7
        %v1069 = vsub.s32 1, %v1068
        %v1070 = vrot.slane %v1061, %v1069
        %v1073 = vmul.f32 %v1058, %v1066
        %v1074 = vmul.f32 %v1059, %v1070
        %s1075 = scalar_lea.vmem %s2, 24
        %v1076 = vld [vmem:[%s1075] sm:$0xf]
        %v1078 = vsel %vm491, %v1076, 0
        %v1081 = vsel %vm495, %v1073, 0
        %v1084 = vsel %vm495, %v1074, 0
        %1086 = vmatprep.subr.mxu0 %v1084
        %1087 = vmatpush1.msra.mxu0 %v1081
        %1088 = vmatprep.subr.mxu0 0.0
        %1089 = vmatpush1.msra.mxu0 0.0
        %1090 = vmatprep.subr.mxu0 0.0
        %1091 = vmatpush1.msra.mxu0 0.0
        %1092 = vmatprep.subr.mxu0 0.0
        %1093 = vmatpush1.msra.mxu0 0.0
        %1094 = vmatprep.subr.mxu0 0.0
        %1095 = vmatpush1.msra.mxu0 0.0
        %1096 = vmatprep.subr.mxu0 0.0
        %1097 = vmatpush1.msra.mxu0 0.0
        %1098 = vmatprep.subr.mxu0 0.0
        %1099 = vmatpush1.msra.mxu0 0.0
        %1100 = vmatprep.subr.mxu0 0.0
        %1101 = vmatpush1.msra.mxu0 0.0
        %1102 = vmatprep.subr.mxu0 0.0
        %1103 = vmatpush1.msra.mxu0 0.0
        %1104 = vmatprep.subr.mxu0 0.0
        %1105 = vmatpush1.msra.mxu0 0.0
        %1106 = vmatprep.subr.mxu0 0.0
        %1107 = vmatpush1.msra.mxu0 0.0
        %1108 = vmatprep.subr.mxu0 0.0
        %1109 = vmatpush1.msra.mxu0 0.0
        %1110 = vmatprep.subr.mxu0 0.0
        %1111 = vmatpush1.msra.mxu0 0.0
        %1112 = vmatprep.subr.mxu0 0.0
        %1113 = vmatpush1.msra.mxu0 0.0
        %1114 = vmatprep.subr.mxu0 0.0
        %1115 = vmatpush1.msra.mxu0 0.0
        %1116 = vmatprep.subr.mxu0 0.0
        %1117 = vmatpush1.msra.mxu0 0.0
        %1118 = vmatprep.subr.mxu0 0.0
        %1119 = vmatpush1.msra.mxu0 0.0
        %1120 = vmatprep.subr.mxu0 0.0
        %1121 = vmatpush1.msra.mxu0 0.0
        %1122 = vmatprep.subr.mxu0 0.0
        %1123 = vmatpush1.msra.mxu0 0.0
        %1124 = vmatprep.subr.mxu0 0.0
        %1125 = vmatpush1.msra.mxu0 0.0
        %1126 = vmatprep.subr.mxu0 0.0
        %1127 = vmatpush1.msra.mxu0 0.0
        %1128 = vmatprep.subr.mxu0 0.0
        %1129 = vmatpush1.msra.mxu0 0.0
        %1130 = vmatprep.subr.mxu0 0.0
        %1131 = vmatpush1.msra.mxu0 0.0
        %1132 = vmatprep.subr.mxu0 0.0
        %1133 = vmatpush1.msra.mxu0 0.0
        %1134 = vmatprep.subr.mxu0 0.0
        %1135 = vmatpush1.msra.mxu0 0.0
        %1136 = vmatprep.subr.mxu0 0.0
        %1137 = vmatpush1.msra.mxu0 0.0
        %1138 = vmatprep.subr.mxu0 0.0
        %1139 = vmatpush1.msra.mxu0 0.0
        %1140 = vmatprep.subr.mxu0 0.0
        %1141 = vmatpush1.msra.mxu0 0.0
        %1142 = vmatprep.subr.mxu0 0.0
        %1143 = vmatpush1.msra.mxu0 0.0
        %1144 = vmatprep.subr.mxu0 0.0
        %1145 = vmatpush1.msra.mxu0 0.0
        %1146 = vmatprep.subr.mxu0 0.0
        %1147 = vmatpush1.msra.mxu0 0.0
        %1148 = vmatprep.subr.mxu0 0.0
        %1149 = vmatpush1.msra.mxu0 0.0
        %1150 = vmatprep.mubr.f32.mxu0 0.0
        %1151 = vmatmul.mubr.f32.gmra.mrb[0].mxu0 %v1078
        %v1152 = vpop.f32.mrb[0].mxu0
        %v1153 = vadd.f32 0.0, %v1152
        %v1154 = vpop.f32.mrb[0].mxu0
        %v1155 = vadd.f32 0.0, %v1154
        %1156 = vdwg.mxu0
        %v1157 = vadd.f32 %v1051, %v1153
        %v1158 = vadd.f32 %v1052, %v1155
        %1159 = vrot.lane.b32.xlu0 %v439, 112
        %v1160 = vpop.permute.xlu0 %1159
        %1161 = vrot.lane.b32.xlu0 %v441, 112
        %v1162 = vpop.permute.xlu0 %1161
        %vm1163 = vcmp.lt.s32.totalorder %v448, 112
        %v1164 = vsel %vm1163, %v1160, %v1162
        %v1165 = vsel %vm1163, %v1162, %v1160
        %s1166 = scalar_lea.vmem %s1, 14
        %v1167 = vld [vmem:[%s1166] sm:$0x3]
        %v1169 = vlaneseq
        %v1170 = vshrl.u32 %v1169, 7
        %v1171 = vsub.s32 0, %v1170
        %v1172 = vrot.slane %v1167, %v1171
        %v1173 = vlaneseq
        %v1174 = vshrl.u32 %v1173, 7
        %v1175 = vsub.s32 1, %v1174
        %v1176 = vrot.slane %v1167, %v1175
        %v1179 = vmul.f32 %v1164, %v1172
        %v1180 = vmul.f32 %v1165, %v1176
        %s1181 = scalar_lea.vmem %s2, 28
        %v1182 = vld [vmem:[%s1181] sm:$0xf]
        %v1184 = vsel %vm491, %v1182, 0
        %v1187 = vsel %vm495, %v1179, 0
        %v1190 = vsel %vm495, %v1180, 0
        %1192 = vmatprep.subr.mxu0 %v1190
        %1193 = vmatpush1.msra.mxu0 %v1187
        %1194 = vmatprep.subr.mxu0 0.0
        %1195 = vmatpush1.msra.mxu0 0.0
        %1196 = vmatprep.subr.mxu0 0.0
        %1197 = vmatpush1.msra.mxu0 0.0
        %1198 = vmatprep.subr.mxu0 0.0
        %1199 = vmatpush1.msra.mxu0 0.0
        %1200 = vmatprep.subr.mxu0 0.0
        %1201 = vmatpush1.msra.mxu0 0.0
        %1202 = vmatprep.subr.mxu0 0.0
        %1203 = vmatpush1.msra.mxu0 0.0
        %1204 = vmatprep.subr.mxu0 0.0
        %1205 = vmatpush1.msra.mxu0 0.0
        %1206 = vmatprep.subr.mxu0 0.0
        %1207 = vmatpush1.msra.mxu0 0.0
        %1208 = vmatprep.subr.mxu0 0.0
        %1209 = vmatpush1.msra.mxu0 0.0
        %1210 = vmatprep.subr.mxu0 0.0
        %1211 = vmatpush1.msra.mxu0 0.0
        %1212 = vmatprep.subr.mxu0 0.0
        %1213 = vmatpush1.msra.mxu0 0.0
        %1214 = vmatprep.subr.mxu0 0.0
        %1215 = vmatpush1.msra.mxu0 0.0
        %1216 = vmatprep.subr.mxu0 0.0
        %1217 = vmatpush1.msra.mxu0 0.0
        %1218 = vmatprep.subr.mxu0 0.0
        %1219 = vmatpush1.msra.mxu0 0.0
        %1220 = vmatprep.subr.mxu0 0.0
        %1221 = vmatpush1.msra.mxu0 0.0
        %1222 = vmatprep.subr.mxu0 0.0
        %1223 = vmatpush1.msra.mxu0 0.0
        %1224 = vmatprep.subr.mxu0 0.0
        %1225 = vmatpush1.msra.mxu0 0.0
        %1226 = vmatprep.subr.mxu0 0.0
        %1227 = vmatpush1.msra.mxu0 0.0
        %1228 = vmatprep.subr.mxu0 0.0
        %1229 = vmatpush1.msra.mxu0 0.0
        %1230 = vmatprep.subr.mxu0 0.0
        %1231 = vmatpush1.msra.mxu0 0.0
        %1232 = vmatprep.subr.mxu0 0.0
        %1233 = vmatpush1.msra.mxu0 0.0
        %1234 = vmatprep.subr.mxu0 0.0
        %1235 = vmatpush1.msra.mxu0 0.0
        %1236 = vmatprep.subr.mxu0 0.0
        %1237 = vmatpush1.msra.mxu0 0.0
        %1238 = vmatprep.subr.mxu0 0.0
        %1239 = vmatpush1.msra.mxu0 0.0
        %1240 = vmatprep.subr.mxu0 0.0
        %1241 = vmatpush1.msra.mxu0 0.0
        %1242 = vmatprep.subr.mxu0 0.0
        %1243 = vmatpush1.msra.mxu0 0.0
        %1244 = vmatprep.subr.mxu0 0.0
        %1245 = vmatpush1.msra.mxu0 0.0
        %1246 = vmatprep.subr.mxu0 0.0
        %1247 = vmatpush1.msra.mxu0 0.0
        %1248 = vmatprep.subr.mxu0 0.0
        %1249 = vmatpush1.msra.mxu0 0.0
        %1250 = vmatprep.subr.mxu0 0.0
        %1251 = vmatpush1.msra.mxu0 0.0
        %1252 = vmatprep.subr.mxu0 0.0
        %1253 = vmatpush1.msra.mxu0 0.0
        %1254 = vmatprep.subr.mxu0 0.0
        %1255 = vmatpush1.msra.mxu0 0.0
        %1256 = vmatprep.mubr.f32.mxu0 0.0
        %1257 = vmatmul.mubr.f32.gmra.mrb[0].mxu0 %v1184
        %v1258 = vpop.f32.mrb[0].mxu0
        %v1259 = vadd.f32 0.0, %v1258
        %v1260 = vpop.f32.mrb[0].mxu0
        %v1261 = vadd.f32 0.0, %v1260
        %1262 = vdwg.mxu0
        %v1263 = vadd.f32 %v1157, %v1259
        %v1264 = vadd.f32 %v1158, %v1261
        %1265 = vrot.lane.b32.xlu0 %v439, 111
        %v1266 = vpop.permute.xlu0 %1265
        %1267 = vrot.lane.b32.xlu0 %v441, 111
        %v1268 = vpop.permute.xlu0 %1267
        %vm1269 = vcmp.lt.s32.totalorder %v448, 111
        %v1270 = vsel %vm1269, %v1266, %v1268
        %v1271 = vsel %vm1269, %v1268, %v1266
        %s1272 = scalar_lea.vmem %s1, 16
        %v1273 = vld [vmem:[%s1272] sm:$0x3]
        %v1275 = vlaneseq
        %v1276 = vshrl.u32 %v1275, 7
        %v1277 = vsub.s32 0, %v1276
        %v1278 = vrot.slane %v1273, %v1277
        %v1279 = vlaneseq
        %v1280 = vshrl.u32 %v1279, 7
        %v1281 = vsub.s32 1, %v1280
        %v1282 = vrot.slane %v1273, %v1281
        %v1285 = vmul.f32 %v1270, %v1278
        %v1286 = vmul.f32 %v1271, %v1282
        %s1287 = scalar_lea.vmem %s2, 32
        %v1288 = vld [vmem:[%s1287] sm:$0xf]
        %v1290 = vsel %vm491, %v1288, 0
        %v1293 = vsel %vm495, %v1285, 0
        %v1296 = vsel %vm495, %v1286, 0
        %1298 = vmatprep.subr.mxu0 %v1296
        %1299 = vmatpush1.msra.mxu0 %v1293
        %1300 = vmatprep.subr.mxu0 0.0
        %1301 = vmatpush1.msra.mxu0 0.0
        %1302 = vmatprep.subr.mxu0 0.0
        %1303 = vmatpush1.msra.mxu0 0.0
        %1304 = vmatprep.subr.mxu0 0.0
        %1305 = vmatpush1.msra.mxu0 0.0
        %1306 = vmatprep.subr.mxu0 0.0
        %1307 = vmatpush1.msra.mxu0 0.0
        %1308 = vmatprep.subr.mxu0 0.0
        %1309 = vmatpush1.msra.mxu0 0.0
        %1310 = vmatprep.subr.mxu0 0.0
        %1311 = vmatpush1.msra.mxu0 0.0
        %1312 = vmatprep.subr.mxu0 0.0
        %1313 = vmatpush1.msra.mxu0 0.0
        %1314 = vmatprep.subr.mxu0 0.0
        %1315 = vmatpush1.msra.mxu0 0.0
        %1316 = vmatprep.subr.mxu0 0.0
        %1317 = vmatpush1.msra.mxu0 0.0
        %1318 = vmatprep.subr.mxu0 0.0
        %1319 = vmatpush1.msra.mxu0 0.0
        %1320 = vmatprep.subr.mxu0 0.0
        %1321 = vmatpush1.msra.mxu0 0.0
        %1322 = vmatprep.subr.mxu0 0.0
        %1323 = vmatpush1.msra.mxu0 0.0
        %1324 = vmatprep.subr.mxu0 0.0
        %1325 = vmatpush1.msra.mxu0 0.0
        %1326 = vmatprep.subr.mxu0 0.0
        %1327 = vmatpush1.msra.mxu0 0.0
        %1328 = vmatprep.subr.mxu0 0.0
        %1329 = vmatpush1.msra.mxu0 0.0
        %1330 = vmatprep.subr.mxu0 0.0
        %1331 = vmatpush1.msra.mxu0 0.0
        %1332 = vmatprep.subr.mxu0 0.0
        %1333 = vmatpush1.msra.mxu0 0.0
        %1334 = vmatprep.subr.mxu0 0.0
        %1335 = vmatpush1.msra.mxu0 0.0
        %1336 = vmatprep.subr.mxu0 0.0
        %1337 = vmatpush1.msra.mxu0 0.0
        %1338 = vmatprep.subr.mxu0 0.0
        %1339 = vmatpush1.msra.mxu0 0.0
        %1340 = vmatprep.subr.mxu0 0.0
        %1341 = vmatpush1.msra.mxu0 0.0
        %1342 = vmatprep.subr.mxu0 0.0
        %1343 = vmatpush1.msra.mxu0 0.0
        %1344 = vmatprep.subr.mxu0 0.0
        %1345 = vmatpush1.msra.mxu0 0.0
        %1346 = vmatprep.subr.mxu0 0.0
        %1347 = vmatpush1.msra.mxu0 0.0
        %1348 = vmatprep.subr.mxu0 0.0
        %1349 = vmatpush1.msra.mxu0 0.0
        %1350 = vmatprep.subr.mxu0 0.0
        %1351 = vmatpush1.msra.mxu0 0.0
        %1352 = vmatprep.subr.mxu0 0.0
        %1353 = vmatpush1.msra.mxu0 0.0
        %1354 = vmatprep.subr.mxu0 0.0
        %1355 = vmatpush1.msra.mxu0 0.0
        %1356 = vmatprep.subr.mxu0 0.0
        %1357 = vmatpush1.msra.mxu0 0.0
        %1358 = vmatprep.subr.mxu0 0.0
        %1359 = vmatpush1.msra.mxu0 0.0
        %1360 = vmatprep.subr.mxu0 0.0
        %1361 = vmatpush1.msra.mxu0 0.0
        %1362 = vmatprep.mubr.f32.mxu0 0.0
        %1363 = vmatmul.mubr.f32.gmra.mrb[0].mxu0 %v1290
        %v1364 = vpop.f32.mrb[0].mxu0
        %v1365 = vadd.f32 0.0, %v1364
        %v1366 = vpop.f32.mrb[0].mxu0
        %v1367 = vadd.f32 0.0, %v1366
        %1368 = vdwg.mxu0
        %v1369 = vadd.f32 %v1263, %v1365
        %v1370 = vadd.f32 %v1264, %v1367
        %v1371 = vld [vmem:[%s3] sm:$0xf]
        %1373 = vset.pattern.permute.xlu0 0
        %1374 = vperm.xlu0 %1373, %v1371
        %v1375 = vpop.permute.xlu0 %1374
        %v1377 = vadd.f32 %v1369, %v1375
        %v1378 = vadd.f32 %v1370, %v1375
        %vm1379 = vcmp.ge.f32.partialorder %v1377, 0.0
        %vm1380 = vcmp.ge.f32.partialorder %v1378, 0.0
        %v1381 = vld [vmem:[%s4] sm:$0xf]
        %1383 = vset.pattern.permute.xlu0 0
        %1384 = vperm.xlu0 %1383, %v1381
        %v1385 = vpop.permute.xlu0 %1384
        %v1387 = vmul.f32 %v1385, %v1377
        %v1388 = vmul.f32 %v1385, %v1378
        %v1389 = vsel %vm1379, %v1377, %v1387
        %v1390 = vsel %vm1380, %v1378, %v1388
        %1391 = vrot.lane.b32.xlu0 %v1389, 17
        %v1392 = vpop.permute.xlu0 %1391
        %1393 = vrot.lane.b32.xlu0 %v1390, 17
        %v1394 = vpop.permute.xlu0 %1393
        %v1395 = vsel %vm449, %v1392, %v1394
        %v1396 = vsel %vm449, %v1394, %v1392
        %v1397 = vmul.f32 %v1396, %v457
        %v1398 = vmul.f32 %v1395, %v461
        %v1399 = vld [vmem:[%s5] sm:$0xf]
        %1400 = vrot.lane.b32.xlu0 %v1389, 16
        %v1401 = vpop.permute.xlu0 %1400
        %1402 = vrot.lane.b32.xlu0 %v1390, 16
        %v1403 = vpop.permute.xlu0 %1402
        %v1404 = vsel %vm471, %v1401, %v1403
        %v1405 = vsel %vm471, %v1403, %v1401
        %v1406 = vmul.f32 %v1405, %v480
        %v1407 = vmul.f32 %v1404, %v484
        %s1408 = scalar_lea.vmem %s5, 4
        %v1409 = vld [vmem:[%s1408] sm:$0xf]
        %v1411 = vsel %vm491, %v1409, 0
        %v1414 = vsel %vm495, %v1406, 0
        %v1417 = vsel %vm495, %v1407, 0
        %1419 = vmatprep.subr.mxu0 %v1417
        %1420 = vmatpush1.msra.mxu0 %v1414
        %1421 = vmatprep.subr.mxu0 0.0
        %1422 = vmatpush1.msra.mxu0 0.0
        %1423 = vmatprep.subr.mxu0 0.0
        %1424 = vmatpush1.msra.mxu0 0.0
        %1425 = vmatprep.subr.mxu0 0.0
        %1426 = vmatpush1.msra.mxu0 0.0
        %1427 = vmatprep.subr.mxu0 0.0
        %1428 = vmatpush1.msra.mxu0 0.0
        %1429 = vmatprep.subr.mxu0 0.0
        %1430 = vmatpush1.msra.mxu0 0.0
        %1431 = vmatprep.subr.mxu0 0.0
        %1432 = vmatpush1.msra.mxu0 0.0
        %1433 = vmatprep.subr.mxu0 0.0
        %1434 = vmatpush1.msra.mxu0 0.0
        %1435 = vmatprep.subr.mxu0 0.0
        %1436 = vmatpush1.msra.mxu0 0.0
        %1437 = vmatprep.subr.mxu0 0.0
        %1438 = vmatpush1.msra.mxu0 0.0
        %1439 = vmatprep.subr.mxu0 0.0
        %1440 = vmatpush1.msra.mxu0 0.0
        %1441 = vmatprep.subr.mxu0 0.0
        %1442 = vmatpush1.msra.mxu0 0.0
        %1443 = vmatprep.subr.mxu0 0.0
        %1444 = vmatpush1.msra.mxu0 0.0
        %1445 = vmatprep.subr.mxu0 0.0
        %1446 = vmatpush1.msra.mxu0 0.0
        %1447 = vmatprep.subr.mxu0 0.0
        %1448 = vmatpush1.msra.mxu0 0.0
        %1449 = vmatprep.subr.mxu0 0.0
        %1450 = vmatpush1.msra.mxu0 0.0
        %1451 = vmatprep.subr.mxu0 0.0
        %1452 = vmatpush1.msra.mxu0 0.0
        %1453 = vmatprep.subr.mxu0 0.0
        %1454 = vmatpush1.msra.mxu0 0.0
        %1455 = vmatprep.subr.mxu0 0.0
        %1456 = vmatpush1.msra.mxu0 0.0
        %1457 = vmatprep.subr.mxu0 0.0
        %1458 = vmatpush1.msra.mxu0 0.0
        %1459 = vmatprep.subr.mxu0 0.0
        %1460 = vmatpush1.msra.mxu0 0.0
        %1461 = vmatprep.subr.mxu0 0.0
        %1462 = vmatpush1.msra.mxu0 0.0
        %1463 = vmatprep.subr.mxu0 0.0
        %1464 = vmatpush1.msra.mxu0 0.0
        %1465 = vmatprep.subr.mxu0 0.0
        %1466 = vmatpush1.msra.mxu0 0.0
        %1467 = vmatprep.subr.mxu0 0.0
        %1468 = vmatpush1.msra.mxu0 0.0
        %1469 = vmatprep.subr.mxu0 0.0
        %1470 = vmatpush1.msra.mxu0 0.0
        %1471 = vmatprep.subr.mxu0 0.0
        %1472 = vmatpush1.msra.mxu0 0.0
        %1473 = vmatprep.subr.mxu0 0.0
        %1474 = vmatpush1.msra.mxu0 0.0
        %1475 = vmatprep.subr.mxu0 0.0
        %1476 = vmatpush1.msra.mxu0 0.0
        %1477 = vmatprep.subr.mxu0 0.0
        %1478 = vmatpush1.msra.mxu0 0.0
        %1479 = vmatprep.subr.mxu0 0.0
        %1480 = vmatpush1.msra.mxu0 0.0
        %1481 = vmatprep.subr.mxu0 0.0
        %1482 = vmatpush1.msra.mxu0 0.0
        %1483 = vmatprep.mubr.f32.mxu0 0.0
        %1484 = vmatmul.mubr.f32.gmra.mrb[0].mxu0 %v1411
        %v1485 = vpop.f32.mrb[0].mxu0
        %v1486 = vadd.f32 0.0, %v1485
        %v1487 = vpop.f32.mrb[0].mxu0
        %v1488 = vadd.f32 0.0, %v1487
        %1489 = vdwg.mxu0
        %v1491 = vsel %vm491, %v1399, 0
        %v1494 = vsel %vm495, %v1397, 0
        %v1497 = vsel %vm495, %v1398, 0
        %1499 = vmatprep.subr.mxu0 %v1497
        %1500 = vmatpush1.msra.mxu0 %v1494
        %1501 = vmatprep.subr.mxu0 0.0
        %1502 = vmatpush1.msra.mxu0 0.0
        %1503 = vmatprep.subr.mxu0 0.0
        %1504 = vmatpush1.msra.mxu0 0.0
        %1505 = vmatprep.subr.mxu0 0.0
        %1506 = vmatpush1.msra.mxu0 0.0
        %1507 = vmatprep.subr.mxu0 0.0
        %1508 = vmatpush1.msra.mxu0 0.0
        %1509 = vmatprep.subr.mxu0 0.0
        %1510 = vmatpush1.msra.mxu0 0.0
        %1511 = vmatprep.subr.mxu0 0.0
        %1512 = vmatpush1.msra.mxu0 0.0
        %1513 = vmatprep.subr.mxu0 0.0
        %1514 = vmatpush1.msra.mxu0 0.0
        %1515 = vmatprep.subr.mxu0 0.0
        %1516 = vmatpush1.msra.mxu0 0.0
        %1517 = vmatprep.subr.mxu0 0.0
        %1518 = vmatpush1.msra.mxu0 0.0
        %1519 = vmatprep.subr.mxu0 0.0
        %1520 = vmatpush1.msra.mxu0 0.0
        %1521 = vmatprep.subr.mxu0 0.0
        %1522 = vmatpush1.msra.mxu0 0.0
        %1523 = vmatprep.subr.mxu0 0.0
        %1524 = vmatpush1.msra.mxu0 0.0
        %1525 = vmatprep.subr.mxu0 0.0
        %1526 = vmatpush1.msra.mxu0 0.0
        %1527 = vmatprep.subr.mxu0 0.0
        %1528 = vmatpush1.msra.mxu0 0.0
        %1529 = vmatprep.subr.mxu0 0.0
        %1530 = vmatpush1.msra.mxu0 0.0
        %1531 = vmatprep.subr.mxu0 0.0
        %1532 = vmatpush1.msra.mxu0 0.0
        %1533 = vmatprep.subr.mxu0 0.0
        %1534 = vmatpush1.msra.mxu0 0.0
        %1535 = vmatprep.subr.mxu0 0.0
        %1536 = vmatpush1.msra.mxu0 0.0
        %1537 = vmatprep.subr.mxu0 0.0
        %1538 = vmatpush1.msra.mxu0 0.0
        %1539 = vmatprep.subr.mxu0 0.0
        %1540 = vmatpush1.msra.mxu0 0.0
        %1541 = vmatprep.subr.mxu0 0.0
        %1542 = vmatpush1.msra.mxu0 0.0
        %1543 = vmatprep.subr.mxu0 0.0
        %1544 = vmatpush1.msra.mxu0 0.0
        %1545 = vmatprep.subr.mxu0 0.0
        %1546 = vmatpush1.msra.mxu0 0.0
        %1547 = vmatprep.subr.mxu0 0.0
        %1548 = vmatpush1.msra.mxu0 0.0
        %1549 = vmatprep.subr.mxu0 0.0
        %1550 = vmatpush1.msra.mxu0 0.0
        %1551 = vmatprep.subr.mxu0 0.0
        %1552 = vmatpush1.msra.mxu0 0.0
        %1553 = vmatprep.subr.mxu0 0.0
        %1554 = vmatpush1.msra.mxu0 0.0
        %1555 = vmatprep.subr.mxu0 0.0
        %1556 = vmatpush1.msra.mxu0 0.0
        %1557 = vmatprep.subr.mxu0 0.0
        %1558 = vmatpush1.msra.mxu0 0.0
        %1559 = vmatprep.subr.mxu0 0.0
        %1560 = vmatpush1.msra.mxu0 0.0
        %1561 = vmatprep.subr.mxu0 0.0
        %1562 = vmatpush1.msra.mxu0 0.0
        %1563 = vmatprep.mubr.f32.mxu0 0.0
        %1564 = vmatmul.mubr.f32.gmra.mrb[0].mxu0 %v1491
        %v1565 = vpop.f32.mrb[0].mxu0
        %v1566 = vadd.f32 %v1486, %v1565
        %v1567 = vpop.f32.mrb[0].mxu0
        %v1568 = vadd.f32 %v1488, %v1567
        %1569 = vdwg.mxu0
        %1570 = vrot.lane.b32.xlu0 %v1389, 15
        %v1571 = vpop.permute.xlu0 %1570
        %1572 = vrot.lane.b32.xlu0 %v1390, 15
        %v1573 = vpop.permute.xlu0 %1572
        %v1574 = vsel %vm657, %v1571, %v1573
        %v1575 = vsel %vm657, %v1573, %v1571
        %v1576 = vmul.f32 %v1575, %v666
        %v1577 = vmul.f32 %v1574, %v670
        %s1578 = scalar_lea.vmem %s5, 8
        %v1579 = vld [vmem:[%s1578] sm:$0xf]
        %v1581 = vsel %vm491, %v1579, 0
        %v1584 = vsel %vm495, %v1576, 0
        %v1587 = vsel %vm495, %v1577, 0
        %1589 = vmatprep.subr.mxu0 %v1587
        %1590 = vmatpush1.msra.mxu0 %v1584
        %1591 = vmatprep.subr.mxu0 0.0
        %1592 = vmatpush1.msra.mxu0 0.0
        %1593 = vmatprep.subr.mxu0 0.0
        %1594 = vmatpush1.msra.mxu0 0.0
        %1595 = vmatprep.subr.mxu0 0.0
        %1596 = vmatpush1.msra.mxu0 0.0
        %1597 = vmatprep.subr.mxu0 0.0
        %1598 = vmatpush1.msra.mxu0 0.0
        %1599 = vmatprep.subr.mxu0 0.0
        %1600 = vmatpush1.msra.mxu0 0.0
        %1601 = vmatprep.subr.mxu0 0.0
        %1602 = vmatpush1.msra.mxu0 0.0
        %1603 = vmatprep.subr.mxu0 0.0
        %1604 = vmatpush1.msra.mxu0 0.0
        %1605 = vmatprep.subr.mxu0 0.0
        %1606 = vmatpush1.msra.mxu0 0.0
        %1607 = vmatprep.subr.mxu0 0.0
        %1608 = vmatpush1.msra.mxu0 0.0
        %1609 = vmatprep.subr.mxu0 0.0
        %1610 = vmatpush1.msra.mxu0 0.0
        %1611 = vmatprep.subr.mxu0 0.0
        %1612 = vmatpush1.msra.mxu0 0.0
        %1613 = vmatprep.subr.mxu0 0.0
        %1614 = vmatpush1.msra.mxu0 0.0
        %1615 = vmatprep.subr.mxu0 0.0
        %1616 = vmatpush1.msra.mxu0 0.0
        %1617 = vmatprep.subr.mxu0 0.0
        %1618 = vmatpush1.msra.mxu0 0.0
        %1619 = vmatprep.subr.mxu0 0.0
        %1620 = vmatpush1.msra.mxu0 0.0
        %1621 = vmatprep.subr.mxu0 0.0
        %1622 = vmatpush1.msra.mxu0 0.0
        %1623 = vmatprep.subr.mxu0 0.0
        %1624 = vmatpush1.msra.mxu0 0.0
        %1625 = vmatprep.subr.mxu0 0.0
        %1626 = vmatpush1.msra.mxu0 0.0
        %1627 = vmatprep.subr.mxu0 0.0
        %1628 = vmatpush1.msra.mxu0 0.0
        %1629 = vmatprep.subr.mxu0 0.0
        %1630 = vmatpush1.msra.mxu0 0.0
        %1631 = vmatprep.subr.mxu0 0.0
        %1632 = vmatpush1.msra.mxu0 0.0
        %1633 = vmatprep.subr.mxu0 0.0
        %1634 = vmatpush1.msra.mxu0 0.0
        %1635 = vmatprep.subr.mxu0 0.0
        %1636 = vmatpush1.msra.mxu0 0.0
        %1637 = vmatprep.subr.mxu0 0.0
        %1638 = vmatpush1.msra.mxu0 0.0
        %1639 = vmatprep.subr.mxu0 0.0
        %1640 = vmatpush1.msra.mxu0 0.0
        %1641 = vmatprep.subr.mxu0 0.0
        %1642 = vmatpush1.msra.mxu0 0.0
        %1643 = vmatprep.subr.mxu0 0.0
        %1644 = vmatpush1.msra.mxu0 0.0
        %1645 = vmatprep.subr.mxu0 0.0
        %1646 = vmatpush1.msra.mxu0 0.0
        %1647 = vmatprep.subr.mxu0 0.0
        %1648 = vmatpush1.msra.mxu0 0.0
        %1649 = vmatprep.subr.mxu0 0.0
        %1650 = vmatpush1.msra.mxu0 0.0
        %1651 = vmatprep.subr.mxu0 0.0
        %1652 = vmatpush1.msra.mxu0 0.0
        %1653 = vmatprep.mubr.f32.mxu0 0.0
        %1654 = vmatmul.mubr.f32.gmra.mrb[0].mxu0 %v1581
        %v1655 = vpop.f32.mrb[0].mxu0
        %v1656 = vadd.f32 0.0, %v1655
        %v1657 = vpop.f32.mrb[0].mxu0
        %v1658 = vadd.f32 0.0, %v1657
        %1659 = vdwg.mxu0
        %v1660 = vadd.f32 %v1566, %v1656
        %v1661 = vadd.f32 %v1568, %v1658
        %1662 = vrot.lane.b32.xlu0 %v1389, 1
        %v1663 = vpop.permute.xlu0 %1662
        %1664 = vrot.lane.b32.xlu0 %v1390, 1
        %v1665 = vpop.permute.xlu0 %1664
        %v1666 = vsel %vm763, %v1663, %v1665
        %v1667 = vsel %vm763, %v1665, %v1663
        %v1668 = vmul.f32 %v1667, %v772
        %v1669 = vmul.f32 %v1666, %v776
        %s1670 = scalar_lea.vmem %s5, 12
        %v1671 = vld [vmem:[%s1670] sm:$0xf]
        %v1673 = vsel %vm491, %v1671, 0
        %v1676 = vsel %vm495, %v1668, 0
        %v1679 = vsel %vm495, %v1669, 0
        %1681 = vmatprep.subr.mxu0 %v1679
        %1682 = vmatpush1.msra.mxu0 %v1676
        %1683 = vmatprep.subr.mxu0 0.0
        %1684 = vmatpush1.msra.mxu0 0.0
        %1685 = vmatprep.subr.mxu0 0.0
        %1686 = vmatpush1.msra.mxu0 0.0
        %1687 = vmatprep.subr.mxu0 0.0
        %1688 = vmatpush1.msra.mxu0 0.0
        %1689 = vmatprep.subr.mxu0 0.0
        %1690 = vmatpush1.msra.mxu0 0.0
        %1691 = vmatprep.subr.mxu0 0.0
        %1692 = vmatpush1.msra.mxu0 0.0
        %1693 = vmatprep.subr.mxu0 0.0
        %1694 = vmatpush1.msra.mxu0 0.0
        %1695 = vmatprep.subr.mxu0 0.0
        %1696 = vmatpush1.msra.mxu0 0.0
        %1697 = vmatprep.subr.mxu0 0.0
        %1698 = vmatpush1.msra.mxu0 0.0
        %1699 = vmatprep.subr.mxu0 0.0
        %1700 = vmatpush1.msra.mxu0 0.0
        %1701 = vmatprep.subr.mxu0 0.0
        %1702 = vmatpush1.msra.mxu0 0.0
        %1703 = vmatprep.subr.mxu0 0.0
        %1704 = vmatpush1.msra.mxu0 0.0
        %1705 = vmatprep.subr.mxu0 0.0
        %1706 = vmatpush1.msra.mxu0 0.0
        %1707 = vmatprep.subr.mxu0 0.0
        %1708 = vmatpush1.msra.mxu0 0.0
        %1709 = vmatprep.subr.mxu0 0.0
        %1710 = vmatpush1.msra.mxu0 0.0
        %1711 = vmatprep.subr.mxu0 0.0
        %1712 = vmatpush1.msra.mxu0 0.0
        %1713 = vmatprep.subr.mxu0 0.0
        %1714 = vmatpush1.msra.mxu0 0.0
        %1715 = vmatprep.subr.mxu0 0.0
        %1716 = vmatpush1.msra.mxu0 0.0
        %1717 = vmatprep.subr.mxu0 0.0
        %1718 = vmatpush1.msra.mxu0 0.0
        %1719 = vmatprep.subr.mxu0 0.0
        %1720 = vmatpush1.msra.mxu0 0.0
        %1721 = vmatprep.subr.mxu0 0.0
        %1722 = vmatpush1.msra.mxu0 0.0
        %1723 = vmatprep.subr.mxu0 0.0
        %1724 = vmatpush1.msra.mxu0 0.0
        %1725 = vmatprep.subr.mxu0 0.0
        %1726 = vmatpush1.msra.mxu0 0.0
        %1727 = vmatprep.subr.mxu0 0.0
        %1728 = vmatpush1.msra.mxu0 0.0
        %1729 = vmatprep.subr.mxu0 0.0
        %1730 = vmatpush1.msra.mxu0 0.0
        %1731 = vmatprep.subr.mxu0 0.0
        %1732 = vmatpush1.msra.mxu0 0.0
        %1733 = vmatprep.subr.mxu0 0.0
        %1734 = vmatpush1.msra.mxu0 0.0
        %1735 = vmatprep.subr.mxu0 0.0
        %1736 = vmatpush1.msra.mxu0 0.0
        %1737 = vmatprep.subr.mxu0 0.0
        %1738 = vmatpush1.msra.mxu0 0.0
        %1739 = vmatprep.subr.mxu0 0.0
        %1740 = vmatpush1.msra.mxu0 0.0
        %1741 = vmatprep.subr.mxu0 0.0
        %1742 = vmatpush1.msra.mxu0 0.0
        %1743 = vmatprep.subr.mxu0 0.0
        %1744 = vmatpush1.msra.mxu0 0.0
        %1745 = vmatprep.mubr.f32.mxu0 0.0
        %1746 = vmatmul.mubr.f32.gmra.mrb[0].mxu0 %v1673
        %v1747 = vpop.f32.mrb[0].mxu0
        %v1748 = vadd.f32 0.0, %v1747
        %v1749 = vpop.f32.mrb[0].mxu0
        %v1750 = vadd.f32 0.0, %v1749
        %1751 = vdwg.mxu0
        %v1752 = vadd.f32 %v1660, %v1748
        %v1753 = vadd.f32 %v1661, %v1750
        %s1754 = scalar_lea.vmem %s5, 16
        %v1755 = vld [vmem:[%s1754] sm:$0xf]
        %v1757 = vsel %vm491, %v1755, 0
        %v1760 = vsel %vm495, %v1389, 0
        %v1763 = vsel %vm495, %v1390, 0
        %1765 = vmatprep.subr.mxu0 %v1763
        %1766 = vmatpush1.msra.mxu0 %v1760
        %1767 = vmatprep.subr.mxu0 0.0
        %1768 = vmatpush1.msra.mxu0 0.0
        %1769 = vmatprep.subr.mxu0 0.0
        %1770 = vmatpush1.msra.mxu0 0.0
        %1771 = vmatprep.subr.mxu0 0.0
        %1772 = vmatpush1.msra.mxu0 0.0
        %1773 = vmatprep.subr.mxu0 0.0
        %1774 = vmatpush1.msra.mxu0 0.0
        %1775 = vmatprep.subr.mxu0 0.0
        %1776 = vmatpush1.msra.mxu0 0.0
        %1777 = vmatprep.subr.mxu0 0.0
        %1778 = vmatpush1.msra.mxu0 0.0
        %1779 = vmatprep.subr.mxu0 0.0
        %1780 = vmatpush1.msra.mxu0 0.0
        %1781 = vmatprep.subr.mxu0 0.0
        %1782 = vmatpush1.msra.mxu0 0.0
        %1783 = vmatprep.subr.mxu0 0.0
        %1784 = vmatpush1.msra.mxu0 0.0
        %1785 = vmatprep.subr.mxu0 0.0
        %1786 = vmatpush1.msra.mxu0 0.0
        %1787 = vmatprep.subr.mxu0 0.0
        %1788 = vmatpush1.msra.mxu0 0.0
        %1789 = vmatprep.subr.mxu0 0.0
        %1790 = vmatpush1.msra.mxu0 0.0
        %1791 = vmatprep.subr.mxu0 0.0
        %1792 = vmatpush1.msra.mxu0 0.0
        %1793 = vmatprep.subr.mxu0 0.0
        %1794 = vmatpush1.msra.mxu0 0.0
        %1795 = vmatprep.subr.mxu0 0.0
        %1796 = vmatpush1.msra.mxu0 0.0
        %1797 = vmatprep.subr.mxu0 0.0
        %1798 = vmatpush1.msra.mxu0 0.0
        %1799 = vmatprep.subr.mxu0 0.0
        %1800 = vmatpush1.msra.mxu0 0.0
        %1801 = vmatprep.subr.mxu0 0.0
        %1802 = vmatpush1.msra.mxu0 0.0
        %1803 = vmatprep.subr.mxu0 0.0
        %1804 = vmatpush1.msra.mxu0 0.0
        %1805 = vmatprep.subr.mxu0 0.0
        %1806 = vmatpush1.msra.mxu0 0.0
        %1807 = vmatprep.subr.mxu0 0.0
        %1808 = vmatpush1.msra.mxu0 0.0
        %1809 = vmatprep.subr.mxu0 0.0
        %1810 = vmatpush1.msra.mxu0 0.0
        %1811 = vmatprep.subr.mxu0 0.0
        %1812 = vmatpush1.msra.mxu0 0.0
        %1813 = vmatprep.subr.mxu0 0.0
        %1814 = vmatpush1.msra.mxu0 0.0
        %1815 = vmatprep.subr.mxu0 0.0
        %1816 = vmatpush1.msra.mxu0 0.0
        %1817 = vmatprep.subr.mxu0 0.0
        %1818 = vmatpush1.msra.mxu0 0.0
        %1819 = vmatprep.subr.mxu0 0.0
        %1820 = vmatpush1.msra.mxu0 0.0
        %1821 = vmatprep.subr.mxu0 0.0
        %1822 = vmatpush1.msra.mxu0 0.0
        %1823 = vmatprep.subr.mxu0 0.0
        %1824 = vmatpush1.msra.mxu0 0.0
        %1825 = vmatprep.subr.mxu0 0.0
        %1826 = vmatpush1.msra.mxu0 0.0
        %1827 = vmatprep.subr.mxu0 0.0
        %1828 = vmatpush1.msra.mxu0 0.0
        %1829 = vmatprep.mubr.f32.mxu0 0.0
        %1830 = vmatmul.mubr.f32.gmra.mrb[0].mxu0 %v1757
        %v1831 = vpop.f32.mrb[0].mxu0
        %v1832 = vadd.f32 0.0, %v1831
        %v1833 = vpop.f32.mrb[0].mxu0
        %v1834 = vadd.f32 0.0, %v1833
        %1835 = vdwg.mxu0
        %v1836 = vadd.f32 %v1752, %v1832
        %v1837 = vadd.f32 %v1753, %v1834
        %1838 = vrot.lane.b32.xlu0 %v1389, 127
        %v1839 = vpop.permute.xlu0 %1838
        %1840 = vrot.lane.b32.xlu0 %v1390, 127
        %v1841 = vpop.permute.xlu0 %1840
        %v1842 = vsel %vm951, %v1839, %v1841
        %v1843 = vsel %vm951, %v1841, %v1839
        %v1844 = vmul.f32 %v1842, %v960
        %v1845 = vmul.f32 %v1843, %v964
        %s1846 = scalar_lea.vmem %s5, 20
        %v1847 = vld [vmem:[%s1846] sm:$0xf]
        %v1849 = vsel %vm491, %v1847, 0
        %v1852 = vsel %vm495, %v1844, 0
        %v1855 = vsel %vm495, %v1845, 0
        %1857 = vmatprep.subr.mxu0 %v1855
        %1858 = vmatpush1.msra.mxu0 %v1852
        %1859 = vmatprep.subr.mxu0 0.0
        %1860 = vmatpush1.msra.mxu0 0.0
        %1861 = vmatprep.subr.mxu0 0.0
        %1862 = vmatpush1.msra.mxu0 0.0
        %1863 = vmatprep.subr.mxu0 0.0
        %1864 = vmatpush1.msra.mxu0 0.0
        %1865 = vmatprep.subr.mxu0 0.0
        %1866 = vmatpush1.msra.mxu0 0.0
        %1867 = vmatprep.subr.mxu0 0.0
        %1868 = vmatpush1.msra.mxu0 0.0
        %1869 = vmatprep.subr.mxu0 0.0
        %1870 = vmatpush1.msra.mxu0 0.0
        %1871 = vmatprep.subr.mxu0 0.0
        %1872 = vmatpush1.msra.mxu0 0.0
        %1873 = vmatprep.subr.mxu0 0.0
        %1874 = vmatpush1.msra.mxu0 0.0
        %1875 = vmatprep.subr.mxu0 0.0
        %1876 = vmatpush1.msra.mxu0 0.0
        %1877 = vmatprep.subr.mxu0 0.0
        %1878 = vmatpush1.msra.mxu0 0.0
        %1879 = vmatprep.subr.mxu0 0.0
        %1880 = vmatpush1.msra.mxu0 0.0
        %1881 = vmatprep.subr.mxu0 0.0
        %1882 = vmatpush1.msra.mxu0 0.0
        %1883 = vmatprep.subr.mxu0 0.0
        %1884 = vmatpush1.msra.mxu0 0.0
        %1885 = vmatprep.subr.mxu0 0.0
        %1886 = vmatpush1.msra.mxu0 0.0
        %1887 = vmatprep.subr.mxu0 0.0
        %1888 = vmatpush1.msra.mxu0 0.0
        %1889 = vmatprep.subr.mxu0 0.0
        %1890 = vmatpush1.msra.mxu0 0.0
        %1891 = vmatprep.subr.mxu0 0.0
        %1892 = vmatpush1.msra.mxu0 0.0
        %1893 = vmatprep.subr.mxu0 0.0
        %1894 = vmatpush1.msra.mxu0 0.0
        %1895 = vmatprep.subr.mxu0 0.0
        %1896 = vmatpush1.msra.mxu0 0.0
        %1897 = vmatprep.subr.mxu0 0.0
        %1898 = vmatpush1.msra.mxu0 0.0
        %1899 = vmatprep.subr.mxu0 0.0
        %1900 = vmatpush1.msra.mxu0 0.0
        %1901 = vmatprep.subr.mxu0 0.0
        %1902 = vmatpush1.msra.mxu0 0.0
        %1903 = vmatprep.subr.mxu0 0.0
        %1904 = vmatpush1.msra.mxu0 0.0
        %1905 = vmatprep.subr.mxu0 0.0
        %1906 = vmatpush1.msra.mxu0 0.0
        %1907 = vmatprep.subr.mxu0 0.0
        %1908 = vmatpush1.msra.mxu0 0.0
        %1909 = vmatprep.subr.mxu0 0.0
        %1910 = vmatpush1.msra.mxu0 0.0
        %1911 = vmatprep.subr.mxu0 0.0
        %1912 = vmatpush1.msra.mxu0 0.0
        %1913 = vmatprep.subr.mxu0 0.0
        %1914 = vmatpush1.msra.mxu0 0.0
        %1915 = vmatprep.subr.mxu0 0.0
        %1916 = vmatpush1.msra.mxu0 0.0
        %1917 = vmatprep.subr.mxu0 0.0
        %1918 = vmatpush1.msra.mxu0 0.0
        %1919 = vmatprep.subr.mxu0 0.0
        %1920 = vmatpush1.msra.mxu0 0.0
        %1921 = vmatprep.mubr.f32.mxu0 0.0
        %1922 = vmatmul.mubr.f32.gmra.mrb[0].mxu0 %v1849
        %v1923 = vpop.f32.mrb[0].mxu0
        %v1924 = vadd.f32 0.0, %v1923
        %v1925 = vpop.f32.mrb[0].mxu0
        %v1926 = vadd.f32 0.0, %v1925
        %1927 = vdwg.mxu0
        %v1928 = vadd.f32 %v1836, %v1924
        %v1929 = vadd.f32 %v1837, %v1926
        %1930 = vrot.lane.b32.xlu0 %v1389, 113
        %v1931 = vpop.permute.xlu0 %1930
        %1932 = vrot.lane.b32.xlu0 %v1390, 113
        %v1933 = vpop.permute.xlu0 %1932
        %v1934 = vsel %vm1057, %v1931, %v1933
        %v1935 = vsel %vm1057, %v1933, %v1931
        %v1936 = vmul.f32 %v1934, %v1066
        %v1937 = vmul.f32 %v1935, %v1070
        %s1938 = scalar_lea.vmem %s5, 24
        %v1939 = vld [vmem:[%s1938] sm:$0xf]
        %v1941 = vsel %vm491, %v1939, 0
        %v1944 = vsel %vm495, %v1936, 0
        %v1947 = vsel %vm495, %v1937, 0
        %1949 = vmatprep.subr.mxu0 %v1947
        %1950 = vmatpush1.msra.mxu0 %v1944
        %1951 = vmatprep.subr.mxu0 0.0
        %1952 = vmatpush1.msra.mxu0 0.0
        %1953 = vmatprep.subr.mxu0 0.0
        %1954 = vmatpush1.msra.mxu0 0.0
        %1955 = vmatprep.subr.mxu0 0.0
        %1956 = vmatpush1.msra.mxu0 0.0
        %1957 = vmatprep.subr.mxu0 0.0
        %1958 = vmatpush1.msra.mxu0 0.0
        %1959 = vmatprep.subr.mxu0 0.0
        %1960 = vmatpush1.msra.mxu0 0.0
        %1961 = vmatprep.subr.mxu0 0.0
        %1962 = vmatpush1.msra.mxu0 0.0
        %1963 = vmatprep.subr.mxu0 0.0
        %1964 = vmatpush1.msra.mxu0 0.0
        %1965 = vmatprep.subr.mxu0 0.0
        %1966 = vmatpush1.msra.mxu0 0.0
        %1967 = vmatprep.subr.mxu0 0.0
        %1968 = vmatpush1.msra.mxu0 0.0
        %1969 = vmatprep.subr.mxu0 0.0
        %1970 = vmatpush1.msra.mxu0 0.0
        %1971 = vmatprep.subr.mxu0 0.0
        %1972 = vmatpush1.msra.mxu0 0.0
        %1973 = vmatprep.subr.mxu0 0.0
        %1974 = vmatpush1.msra.mxu0 0.0
        %1975 = vmatprep.subr.mxu0 0.0
        %1976 = vmatpush1.msra.mxu0 0.0
        %1977 = vmatprep.subr.mxu0 0.0
        %1978 = vmatpush1.msra.mxu0 0.0
        %1979 = vmatprep.subr.mxu0 0.0
        %1980 = vmatpush1.msra.mxu0 0.0
        %1981 = vmatprep.subr.mxu0 0.0
        %1982 = vmatpush1.msra.mxu0 0.0
        %1983 = vmatprep.subr.mxu0 0.0
        %1984 = vmatpush1.msra.mxu0 0.0
        %1985 = vmatprep.subr.mxu0 0.0
        %1986 = vmatpush1.msra.mxu0 0.0
        %1987 = vmatprep.subr.mxu0 0.0
        %1988 = vmatpush1.msra.mxu0 0.0
        %1989 = vmatprep.subr.mxu0 0.0
        %1990 = vmatpush1.msra.mxu0 0.0
        %1991 = vmatprep.subr.mxu0 0.0
        %1992 = vmatpush1.msra.mxu0 0.0
        %1993 = vmatprep.subr.mxu0 0.0
        %1994 = vmatpush1.msra.mxu0 0.0
        %1995 = vmatprep.subr.mxu0 0.0
        %1996 = vmatpush1.msra.mxu0 0.0
        %1997 = vmatprep.subr.mxu0 0.0
        %1998 = vmatpush1.msra.mxu0 0.0
        %1999 = vmatprep.subr.mxu0 0.0
        %2000 = vmatpush1.msra.mxu0 0.0
        %2001 = vmatprep.subr.mxu0 0.0
        %2002 = vmatpush1.msra.mxu0 0.0
        %2003 = vmatprep.subr.mxu0 0.0
        %2004 = vmatpush1.msra.mxu0 0.0
        %2005 = vmatprep.subr.mxu0 0.0
        %2006 = vmatpush1.msra.mxu0 0.0
        %2007 = vmatprep.subr.mxu0 0.0
        %2008 = vmatpush1.msra.mxu0 0.0
        %2009 = vmatprep.subr.mxu0 0.0
        %2010 = vmatpush1.msra.mxu0 0.0
        %2011 = vmatprep.subr.mxu0 0.0
        %2012 = vmatpush1.msra.mxu0 0.0
        %2013 = vmatprep.mubr.f32.mxu0 0.0
        %2014 = vmatmul.mubr.f32.gmra.mrb[0].mxu0 %v1941
        %v2015 = vpop.f32.mrb[0].mxu0
        %v2016 = vadd.f32 0.0, %v2015
        %v2017 = vpop.f32.mrb[0].mxu0
        %v2018 = vadd.f32 0.0, %v2017
        %2019 = vdwg.mxu0
        %v2020 = vadd.f32 %v1928, %v2016
        %v2021 = vadd.f32 %v1929, %v2018
        %2022 = vrot.lane.b32.xlu0 %v1389, 112
        %v2023 = vpop.permute.xlu0 %2022
        %2024 = vrot.lane.b32.xlu0 %v1390, 112
        %v2025 = vpop.permute.xlu0 %2024
        %v2026 = vsel %vm1163, %v2023, %v2025
        %v2027 = vsel %vm1163, %v2025, %v2023
        %v2028 = vmul.f32 %v2026, %v1172
        %v2029 = vmul.f32 %v2027, %v1176
        %s2030 = scalar_lea.vmem %s5, 28
        %v2031 = vld [vmem:[%s2030] sm:$0xf]
        %v2033 = vsel %vm491, %v2031, 0
        %v2036 = vsel %vm495, %v2028, 0
        %v2039 = vsel %vm495, %v2029, 0
        %2041 = vmatprep.subr.mxu0 %v2039
        %2042 = vmatpush1.msra.mxu0 %v2036
        %2043 = vmatprep.subr.mxu0 0.0
        %2044 = vmatpush1.msra.mxu0 0.0
        %2045 = vmatprep.subr.mxu0 0.0
        %2046 = vmatpush1.msra.mxu0 0.0
        %2047 = vmatprep.subr.mxu0 0.0
        %2048 = vmatpush1.msra.mxu0 0.0
        %2049 = vmatprep.subr.mxu0 0.0
        %2050 = vmatpush1.msra.mxu0 0.0
        %2051 = vmatprep.subr.mxu0 0.0
        %2052 = vmatpush1.msra.mxu0 0.0
        %2053 = vmatprep.subr.mxu0 0.0
        %2054 = vmatpush1.msra.mxu0 0.0
        %2055 = vmatprep.subr.mxu0 0.0
        %2056 = vmatpush1.msra.mxu0 0.0
        %2057 = vmatprep.subr.mxu0 0.0
        %2058 = vmatpush1.msra.mxu0 0.0
        %2059 = vmatprep.subr.mxu0 0.0
        %2060 = vmatpush1.msra.mxu0 0.0
        %2061 = vmatprep.subr.mxu0 0.0
        %2062 = vmatpush1.msra.mxu0 0.0
        %2063 = vmatprep.subr.mxu0 0.0
        %2064 = vmatpush1.msra.mxu0 0.0
        %2065 = vmatprep.subr.mxu0 0.0
        %2066 = vmatpush1.msra.mxu0 0.0
        %2067 = vmatprep.subr.mxu0 0.0
        %2068 = vmatpush1.msra.mxu0 0.0
        %2069 = vmatprep.subr.mxu0 0.0
        %2070 = vmatpush1.msra.mxu0 0.0
        %2071 = vmatprep.subr.mxu0 0.0
        %2072 = vmatpush1.msra.mxu0 0.0
        %2073 = vmatprep.subr.mxu0 0.0
        %2074 = vmatpush1.msra.mxu0 0.0
        %2075 = vmatprep.subr.mxu0 0.0
        %2076 = vmatpush1.msra.mxu0 0.0
        %2077 = vmatprep.subr.mxu0 0.0
        %2078 = vmatpush1.msra.mxu0 0.0
        %2079 = vmatprep.subr.mxu0 0.0
        %2080 = vmatpush1.msra.mxu0 0.0
        %2081 = vmatprep.subr.mxu0 0.0
        %2082 = vmatpush1.msra.mxu0 0.0
        %2083 = vmatprep.subr.mxu0 0.0
        %2084 = vmatpush1.msra.mxu0 0.0
        %2085 = vmatprep.subr.mxu0 0.0
        %2086 = vmatpush1.msra.mxu0 0.0
        %2087 = vmatprep.subr.mxu0 0.0
        %2088 = vmatpush1.msra.mxu0 0.0
        %2089 = vmatprep.subr.mxu0 0.0
        %2090 = vmatpush1.msra.mxu0 0.0
        %2091 = vmatprep.subr.mxu0 0.0
        %2092 = vmatpush1.msra.mxu0 0.0
        %2093 = vmatprep.subr.mxu0 0.0
        %2094 = vmatpush1.msra.mxu0 0.0
        %2095 = vmatprep.subr.mxu0 0.0
        %2096 = vmatpush1.msra.mxu0 0.0
        %2097 = vmatprep.subr.mxu0 0.0
        %2098 = vmatpush1.msra.mxu0 0.0
        %2099 = vmatprep.subr.mxu0 0.0
        %2100 = vmatpush1.msra.mxu0 0.0
        %2101 = vmatprep.subr.mxu0 0.0
        %2102 = vmatpush1.msra.mxu0 0.0
        %2103 = vmatprep.subr.mxu0 0.0
        %2104 = vmatpush1.msra.mxu0 0.0
        %2105 = vmatprep.mubr.f32.mxu0 0.0
        %2106 = vmatmul.mubr.f32.gmra.mrb[0].mxu0 %v2033
        %v2107 = vpop.f32.mrb[0].mxu0
        %v2108 = vadd.f32 0.0, %v2107
        %v2109 = vpop.f32.mrb[0].mxu0
        %v2110 = vadd.f32 0.0, %v2109
        %2111 = vdwg.mxu0
        %v2112 = vadd.f32 %v2020, %v2108
        %v2113 = vadd.f32 %v2021, %v2110
        %2114 = vrot.lane.b32.xlu0 %v1389, 111
        %v2115 = vpop.permute.xlu0 %2114
        %2116 = vrot.lane.b32.xlu0 %v1390, 111
        %v2117 = vpop.permute.xlu0 %2116
        %v2118 = vsel %vm1269, %v2115, %v2117
        %v2119 = vsel %vm1269, %v2117, %v2115
        %v2120 = vmul.f32 %v2118, %v1278
        %v2121 = vmul.f32 %v2119, %v1282
        %s2122 = scalar_lea.vmem %s5, 32
        %v2123 = vld [vmem:[%s2122] sm:$0xf]
        %v2125 = vsel %vm491, %v2123, 0
        %v2128 = vsel %vm495, %v2120, 0
        %v2131 = vsel %vm495, %v2121, 0
        %2133 = vmatprep.subr.mxu0 %v2131
        %2134 = vmatpush1.msra.mxu0 %v2128
        %2135 = vmatprep.subr.mxu0 0.0
        %2136 = vmatpush1.msra.mxu0 0.0
        %2137 = vmatprep.subr.mxu0 0.0
        %2138 = vmatpush1.msra.mxu0 0.0
        %2139 = vmatprep.subr.mxu0 0.0
        %2140 = vmatpush1.msra.mxu0 0.0
        %2141 = vmatprep.subr.mxu0 0.0
        %2142 = vmatpush1.msra.mxu0 0.0
        %2143 = vmatprep.subr.mxu0 0.0
        %2144 = vmatpush1.msra.mxu0 0.0
        %2145 = vmatprep.subr.mxu0 0.0
        %2146 = vmatpush1.msra.mxu0 0.0
        %2147 = vmatprep.subr.mxu0 0.0
        %2148 = vmatpush1.msra.mxu0 0.0
        %2149 = vmatprep.subr.mxu0 0.0
        %2150 = vmatpush1.msra.mxu0 0.0
        %2151 = vmatprep.subr.mxu0 0.0
        %2152 = vmatpush1.msra.mxu0 0.0
        %2153 = vmatprep.subr.mxu0 0.0
        %2154 = vmatpush1.msra.mxu0 0.0
        %2155 = vmatprep.subr.mxu0 0.0
        %2156 = vmatpush1.msra.mxu0 0.0
        %2157 = vmatprep.subr.mxu0 0.0
        %2158 = vmatpush1.msra.mxu0 0.0
        %2159 = vmatprep.subr.mxu0 0.0
        %2160 = vmatpush1.msra.mxu0 0.0
        %2161 = vmatprep.subr.mxu0 0.0
        %2162 = vmatpush1.msra.mxu0 0.0
        %2163 = vmatprep.subr.mxu0 0.0
        %2164 = vmatpush1.msra.mxu0 0.0
        %2165 = vmatprep.subr.mxu0 0.0
        %2166 = vmatpush1.msra.mxu0 0.0
        %2167 = vmatprep.subr.mxu0 0.0
        %2168 = vmatpush1.msra.mxu0 0.0
        %2169 = vmatprep.subr.mxu0 0.0
        %2170 = vmatpush1.msra.mxu0 0.0
        %2171 = vmatprep.subr.mxu0 0.0
        %2172 = vmatpush1.msra.mxu0 0.0
        %2173 = vmatprep.subr.mxu0 0.0
        %2174 = vmatpush1.msra.mxu0 0.0
        %2175 = vmatprep.subr.mxu0 0.0
        %2176 = vmatpush1.msra.mxu0 0.0
        %2177 = vmatprep.subr.mxu0 0.0
        %2178 = vmatpush1.msra.mxu0 0.0
        %2179 = vmatprep.subr.mxu0 0.0
        %2180 = vmatpush1.msra.mxu0 0.0
        %2181 = vmatprep.subr.mxu0 0.0
        %2182 = vmatpush1.msra.mxu0 0.0
        %2183 = vmatprep.subr.mxu0 0.0
        %2184 = vmatpush1.msra.mxu0 0.0
        %2185 = vmatprep.subr.mxu0 0.0
        %2186 = vmatpush1.msra.mxu0 0.0
        %2187 = vmatprep.subr.mxu0 0.0
        %2188 = vmatpush1.msra.mxu0 0.0
        %2189 = vmatprep.subr.mxu0 0.0
        %2190 = vmatpush1.msra.mxu0 0.0
        %2191 = vmatprep.subr.mxu0 0.0
        %2192 = vmatpush1.msra.mxu0 0.0
        %2193 = vmatprep.subr.mxu0 0.0
        %2194 = vmatpush1.msra.mxu0 0.0
        %2195 = vmatprep.subr.mxu0 0.0
        %2196 = vmatpush1.msra.mxu0 0.0
        %2197 = vmatprep.mubr.f32.mxu0 0.0
        %2198 = vmatmul.mubr.f32.gmra.mrb[0].mxu0 %v2125
        %v2199 = vpop.f32.mrb[0].mxu0
        %v2200 = vadd.f32 0.0, %v2199
        %v2201 = vpop.f32.mrb[0].mxu0
        %v2202 = vadd.f32 0.0, %v2201
        %2203 = vdwg.mxu0
        %v2204 = vadd.f32 %v2112, %v2200
        %v2205 = vadd.f32 %v2113, %v2202
        %v2206 = vld [vmem:[%s6] sm:$0xf]
        %2208 = vset.pattern.permute.xlu0 0
        %2209 = vperm.xlu0 %2208, %v2206
        %v2210 = vpop.permute.xlu0 %2209
        %v2212 = vadd.f32 %v2204, %v2210
        %v2213 = vadd.f32 %v2205, %v2210
        %v2214 = vsel %vm495, %v2212, 0.0
        %v2215 = vsel %vm495, %v2213, 0.0
        %v2216 = vadd.f32 %v2214, %v2215
        %2217 = vadd.xlane.f32.xlu0 %v2216
        %v2218 = vpop.xlane.xlu0 %2217
        %v2219 = vmul.f32 %v2218, 0.00390625
        %v2220 = vsub.f32 %v2212, %v2219
        %v2221 = vsub.f32 %v2213, %v2219
        %v2222 = vmul.f32 %v2220, %v2220
        %v2223 = vmul.f32 %v2221, %v2221
        %v2224 = vsel %vm495, %v2222, 0.0
        %v2225 = vsel %vm495, %v2223, 0.0
        %v2226 = vadd.f32 %v2224, %v2225
        %2227 = vadd.xlane.f32.xlu0 %v2226
        %v2228 = vpop.xlane.xlu0 %2227
        %v2229 = vmul.f32 %v2228, 0.00390625
        %v2230 = vrsqrt.pop %v2229
        %v2231 = vmul.f32 %v2229, %v2230
        %vm2232 = vcmp.eq.f32.partialorder %v2229, inf
        %v2233 = vsel %vm2232, %v2229, %v2231
        %vm2234 = vcmp.eq.f32.partialorder %v2229, 0.0
        %v2235 = vand.u32 %v2229, 2147483648
        %v2236 = vsel %vm2234, %v2235, %v2233
        %v2237 = vld [vmem:[%s7] sm:$0x3]
        %v2238 = vld [vmem:[%s8] sm:$0x3]
        %v2240 = vsel %vm491, %v2238, 0
        %v2243 = vsel %vm495, %v2236, 0
        %2245 = vmatprep.subr.mxu0 0.0
        %2246 = vmatpush1.msra.mxu0 %v2243
        %2247 = vmatprep.subr.mxu0 0.0
        %2248 = vmatpush1.msra.mxu0 0.0
        %2249 = vmatprep.subr.mxu0 0.0
        %2250 = vmatpush1.msra.mxu0 0.0
        %2251 = vmatprep.subr.mxu0 0.0
        %2252 = vmatpush1.msra.mxu0 0.0
        %2253 = vmatprep.subr.mxu0 0.0
        %2254 = vmatpush1.msra.mxu0 0.0
        %2255 = vmatprep.subr.mxu0 0.0
        %2256 = vmatpush1.msra.mxu0 0.0
        %2257 = vmatprep.subr.mxu0 0.0
        %2258 = vmatpush1.msra.mxu0 0.0
        %2259 = vmatprep.subr.mxu0 0.0
        %2260 = vmatpush1.msra.mxu0 0.0
        %2261 = vmatprep.subr.mxu0 0.0
        %2262 = vmatpush1.msra.mxu0 0.0
        %2263 = vmatprep.subr.mxu0 0.0
        %2264 = vmatpush1.msra.mxu0 0.0
        %2265 = vmatprep.subr.mxu0 0.0
        %2266 = vmatpush1.msra.mxu0 0.0
        %2267 = vmatprep.subr.mxu0 0.0
        %2268 = vmatpush1.msra.mxu0 0.0
        %2269 = vmatprep.subr.mxu0 0.0
        %2270 = vmatpush1.msra.mxu0 0.0
        %2271 = vmatprep.subr.mxu0 0.0
        %2272 = vmatpush1.msra.mxu0 0.0
        %2273 = vmatprep.subr.mxu0 0.0
        %2274 = vmatpush1.msra.mxu0 0.0
        %2275 = vmatprep.subr.mxu0 0.0
        %2276 = vmatpush1.msra.mxu0 0.0
        %2277 = vmatprep.subr.mxu0 0.0
        %2278 = vmatpush1.msra.mxu0 0.0
        %2279 = vmatprep.subr.mxu0 0.0
        %2280 = vmatpush1.msra.mxu0 0.0
        %2281 = vmatprep.subr.mxu0 0.0
        %2282 = vmatpush1.msra.mxu0 0.0
        %2283 = vmatprep.subr.mxu0 0.0
        %2284 = vmatpush1.msra.mxu0 0.0
        %2285 = vmatprep.subr.mxu0 0.0
        %2286 = vmatpush1.msra.mxu0 0.0
        %2287 = vmatprep.subr.mxu0 0.0
        %2288 = vmatpush1.msra.mxu0 0.0
        %2289 = vmatprep.subr.mxu0 0.0
        %2290 = vmatpush1.msra.mxu0 0.0
        %2291 = vmatprep.subr.mxu0 0.0
        %2292 = vmatpush1.msra.mxu0 0.0
        %2293 = vmatprep.subr.mxu0 0.0
        %2294 = vmatpush1.msra.mxu0 0.0
        %2295 = vmatprep.subr.mxu0 0.0
        %2296 = vmatpush1.msra.mxu0 0.0
        %2297 = vmatprep.subr.mxu0 0.0
        %2298 = vmatpush1.msra.mxu0 0.0
        %2299 = vmatprep.subr.mxu0 0.0
        %2300 = vmatpush1.msra.mxu0 0.0
        %2301 = vmatprep.subr.mxu0 0.0
        %2302 = vmatpush1.msra.mxu0 0.0
        %2303 = vmatprep.subr.mxu0 0.0
        %2304 = vmatpush1.msra.mxu0 0.0
        %2305 = vmatprep.subr.mxu0 0.0
        %2306 = vmatpush1.msra.mxu0 0.0
        %2307 = vmatprep.subr.mxu0 0.0
        %2308 = vmatpush1.msra.mxu0 0.0
        %2309 = vmatprep.mubr.f32.mxu0 0.0
        %2310 = vmatmul.mubr.f32.gmra.mrb[0].mxu0 %v2240
        %v2311 = vpop.f32.mrb[0].mxu0
        %v2312 = vadd.f32 0.0, %v2311
        %v2313 = vpop.f32.mrb[0].mxu0
        %2314 = vdwg.mxu0
        %v2316 = vsel %vm491, %v2237, 0
        %v2319 = vsel %vm495, %v2219, 0
        %2321 = vmatprep.subr.mxu0 0.0
        %2322 = vmatpush1.msra.mxu0 %v2319
        %2323 = vmatprep.subr.mxu0 0.0
        %2324 = vmatpush1.msra.mxu0 0.0
        %2325 = vmatprep.subr.mxu0 0.0
        %2326 = vmatpush1.msra.mxu0 0.0
        %2327 = vmatprep.subr.mxu0 0.0
        %2328 = vmatpush1.msra.mxu0 0.0
        %2329 = vmatprep.subr.mxu0 0.0
        %2330 = vmatpush1.msra.mxu0 0.0
        %2331 = vmatprep.subr.mxu0 0.0
        %2332 = vmatpush1.msra.mxu0 0.0
        %2333 = vmatprep.subr.mxu0 0.0
        %2334 = vmatpush1.msra.mxu0 0.0
        %2335 = vmatprep.subr.mxu0 0.0
        %2336 = vmatpush1.msra.mxu0 0.0
        %2337 = vmatprep.subr.mxu0 0.0
        %2338 = vmatpush1.msra.mxu0 0.0
        %2339 = vmatprep.subr.mxu0 0.0
        %2340 = vmatpush1.msra.mxu0 0.0
        %2341 = vmatprep.subr.mxu0 0.0
        %2342 = vmatpush1.msra.mxu0 0.0
        %2343 = vmatprep.subr.mxu0 0.0
        %2344 = vmatpush1.msra.mxu0 0.0
        %2345 = vmatprep.subr.mxu0 0.0
        %2346 = vmatpush1.msra.mxu0 0.0
        %2347 = vmatprep.subr.mxu0 0.0
        %2348 = vmatpush1.msra.mxu0 0.0
        %2349 = vmatprep.subr.mxu0 0.0
        %2350 = vmatpush1.msra.mxu0 0.0
        %2351 = vmatprep.subr.mxu0 0.0
        %2352 = vmatpush1.msra.mxu0 0.0
        %2353 = vmatprep.subr.mxu0 0.0
        %2354 = vmatpush1.msra.mxu0 0.0
        %2355 = vmatprep.subr.mxu0 0.0
        %2356 = vmatpush1.msra.mxu0 0.0
        %2357 = vmatprep.subr.mxu0 0.0
        %2358 = vmatpush1.msra.mxu0 0.0
        %2359 = vmatprep.subr.mxu0 0.0
        %2360 = vmatpush1.msra.mxu0 0.0
        %2361 = vmatprep.subr.mxu0 0.0
        %2362 = vmatpush1.msra.mxu0 0.0
        %2363 = vmatprep.subr.mxu0 0.0
        %2364 = vmatpush1.msra.mxu0 0.0
        %2365 = vmatprep.subr.mxu0 0.0
        %2366 = vmatpush1.msra.mxu0 0.0
        %2367 = vmatprep.subr.mxu0 0.0
        %2368 = vmatpush1.msra.mxu0 0.0
        %2369 = vmatprep.subr.mxu0 0.0
        %2370 = vmatpush1.msra.mxu0 0.0
        %2371 = vmatprep.subr.mxu0 0.0
        %2372 = vmatpush1.msra.mxu0 0.0
        %2373 = vmatprep.subr.mxu0 0.0
        %2374 = vmatpush1.msra.mxu0 0.0
        %2375 = vmatprep.subr.mxu0 0.0
        %2376 = vmatpush1.msra.mxu0 0.0
        %2377 = vmatprep.subr.mxu0 0.0
        %2378 = vmatpush1.msra.mxu0 0.0
        %2379 = vmatprep.subr.mxu0 0.0
        %2380 = vmatpush1.msra.mxu0 0.0
        %2381 = vmatprep.subr.mxu0 0.0
        %2382 = vmatpush1.msra.mxu0 0.0
        %2383 = vmatprep.subr.mxu0 0.0
        %2384 = vmatpush1.msra.mxu0 0.0
        %2385 = vmatprep.mubr.f32.mxu0 0.0
        %2386 = vmatmul.mubr.f32.gmra.mrb[0].mxu0 %v2316
        %v2387 = vpop.f32.mrb[0].mxu0
        %v2388 = vadd.f32 %v2312, %v2387
        %v2389 = vpop.f32.mrb[0].mxu0
        %2390 = vdwg.mxu0
        %v2391 = vld [vmem:[%s9] sm:$0x3]
        %v2392 = vadd.f32 %v2388, %v2391
        %vm2393 = vcmp.ge.f32.partialorder %v2392, 0.0
        %v2394 = vld [vmem:[%s10] sm:$0x3]
        %v2395 = vmul.f32 %v2394, %v2392
        %v2396 = vsel %vm2393, %v2392, %v2395
        %v2397 = vld [vmem:[%s11] sm:$0xf]
        %v2398 = vld [vmem:[%s12] sm:$0xf]
        %vm2399 = vcmask 15360
        %v2401 = vsel %vm2399, %v2397, 0
        %vm2403 = vcmask 1041408
        %v2405 = vsel %vm2403, %v2396, 0
        %2407 = vmatprep.subr.mxu0 0.0
        %2408 = vmatpush1.msra.mxu0 %v2405
        %2409 = vmatprep.subr.mxu0 0.0
        %2410 = vmatpush1.msra.mxu0 0.0
        %2411 = vmatprep.subr.mxu0 0.0
        %2412 = vmatpush1.msra.mxu0 0.0
        %2413 = vmatprep.subr.mxu0 0.0
        %2414 = vmatpush1.msra.mxu0 0.0
        %2415 = vmatprep.subr.mxu0 0.0
        %2416 = vmatpush1.msra.mxu0 0.0
        %2417 = vmatprep.subr.mxu0 0.0
        %2418 = vmatpush1.msra.mxu0 0.0
        %2419 = vmatprep.subr.mxu0 0.0
        %2420 = vmatpush1.msra.mxu0 0.0
        %2421 = vmatprep.subr.mxu0 0.0
        %2422 = vmatpush1.msra.mxu0 0.0
        %2423 = vmatprep.subr.mxu0 0.0
        %2424 = vmatpush1.msra.mxu0 0.0
        %2425 = vmatprep.subr.mxu0 0.0
        %2426 = vmatpush1.msra.mxu0 0.0
        %2427 = vmatprep.subr.mxu0 0.0
        %2428 = vmatpush1.msra.mxu0 0.0
        %2429 = vmatprep.subr.mxu0 0.0
        %2430 = vmatpush1.msra.mxu0 0.0
        %2431 = vmatprep.subr.mxu0 0.0
        %2432 = vmatpush1.msra.mxu0 0.0
        %2433 = vmatprep.subr.mxu0 0.0
        %2434 = vmatpush1.msra.mxu0 0.0
        %2435 = vmatprep.subr.mxu0 0.0
        %2436 = vmatpush1.msra.mxu0 0.0
        %2437 = vmatprep.subr.mxu0 0.0
        %2438 = vmatpush1.msra.mxu0 0.0
        %2439 = vmatprep.subr.mxu0 0.0
        %2440 = vmatpush1.msra.mxu0 0.0
        %2441 = vmatprep.subr.mxu0 0.0
        %2442 = vmatpush1.msra.mxu0 0.0
        %2443 = vmatprep.subr.mxu0 0.0
        %2444 = vmatpush1.msra.mxu0 0.0
        %2445 = vmatprep.subr.mxu0 0.0
        %2446 = vmatpush1.msra.mxu0 0.0
        %2447 = vmatprep.subr.mxu0 0.0
        %2448 = vmatpush1.msra.mxu0 0.0
        %2449 = vmatprep.subr.mxu0 0.0
        %2450 = vmatpush1.msra.mxu0 0.0
        %2451 = vmatprep.subr.mxu0 0.0
        %2452 = vmatpush1.msra.mxu0 0.0
        %2453 = vmatprep.subr.mxu0 0.0
        %2454 = vmatpush1.msra.mxu0 0.0
        %2455 = vmatprep.subr.mxu0 0.0
        %2456 = vmatpush1.msra.mxu0 0.0
        %2457 = vmatprep.subr.mxu0 0.0
        %2458 = vmatpush1.msra.mxu0 0.0
        %2459 = vmatprep.subr.mxu0 0.0
        %2460 = vmatpush1.msra.mxu0 0.0
        %2461 = vmatprep.subr.mxu0 0.0
        %2462 = vmatpush1.msra.mxu0 0.0
        %2463 = vmatprep.subr.mxu0 0.0
        %2464 = vmatpush1.msra.mxu0 0.0
        %2465 = vmatprep.subr.mxu0 0.0
        %2466 = vmatpush1.msra.mxu0 0.0
        %2467 = vmatprep.subr.mxu0 0.0
        %2468 = vmatpush1.msra.mxu0 0.0
        %2469 = vmatprep.subr.mxu0 0.0
        %2470 = vmatpush1.msra.mxu0 0.0
        %2471 = vmatprep.mubr.f32.mxu0 0.0
        %2472 = vmatmul.mubr.f32.gmra.mrb[0].mxu0 %v2401
        %v2473 = vpop.f32.mrb[0].mxu0
        %v2474 = vadd.f32 %v2398, %v2473
        %v2475 = vpop.f32.mrb[0].mxu0
        %2476 = vdwg.mxu0
        %v2477 = vxor.u32 %v2474, 2147483648
        %v2478 = vmul.f32 %v2477, 1.442695
        %v2479 = vpow.pop %v2478
        %v2480 = vadd.f32 %v2479, 1.0
        %v2481 = vrcp.pop %v2480
        %v2482 = vmul.f32 1.0, %v2481
        %v2483 = vadd.f32 %v2482, 1.0
        %2485 = vset.pattern.permute.xlu0 0
        %2486 = vperm.xlu0 %2485, %v2483
        %v2487 = vpop.permute.xlu0 %2486
        %v2489 = vmul.f32 %v2212, %v2487
        %v2490 = vmul.f32 %v2213, %v2487
        %v2491 = vadd.f32 %v2489, %v439
        %v2492 = vadd.f32 %v2490, %v441
        %v2495 = vcombine.low %v2491, %v2492
        %2497 = vst [vmem:[%s433] sm:$0xff] %v2495
        %s2498 = sand.u32 %s313, 1
        %s2499 = scalar_lea.sflag [#allocation3], %s2498
        %s2500 = sand.u32 %s313, 1
        %s2501 = smul.addr %s2500, 8
        %s2502 = scalar_lea.vmem [#allocation2], %s2501
        // Predicated region
        $region73: #{tpu_custom_call.1} parent=71 // pred_check
          %p2503 = pneg %p323
        $region74: #{tpu_custom_call.1} parent=71 // pred_check_branch
          %2505 = sbr.rel (%p2503) target = $region76
        $region75: #{tpu_custom_call.1} parent=71 // pred_region
          %s2507 = ssub.s32 128, 128
          %2508 = vsyncadd %s2499, %s2507
          %s2509 = smul.addr %s27, 2
          %s2510 = smul.addr %s2509, 64
          %s2511 = scalar_lea.hbm %s13, %s2510
          %s2513 = sshll.u32 %s2502, 4
          %s2514 = int_to_ptr.vmem [resolvable:$true] %s2513
          %2516 = dma.vmem_to_hbm [thread:$0]  %s2514, 128, %s2511, %s2499
        $region76: #{tpu_custom_call.1} parent=71 // pred_fallthru
          _
      $region72: #{tpu_custom_call.1} parent=5 // pred_fallthru
        _
      %p2517 = scmp.le.s32.totalorder 2, %s22
      // Predicated region
      $region77: #{tpu_custom_call.1} parent=5 // pred_check
        %p2518 = pneg %p2517
      $region78: #{tpu_custom_call.1} parent=5 // pred_check_branch
        %2520 = sbr.rel (%p2518) target = $region80
      $region79: #{tpu_custom_call.1} parent=5 // pred_region
        %s2521 = ssub.s32 %s22, 2
        // Predicated region
        $region81: #{tpu_custom_call.1} parent=79 // pred_check
          %p2522 = pneg %p329
        $region82: #{tpu_custom_call.1} parent=79 // pred_check_branch
          %2524 = sbr.rel (%p2522) target = $region84
        $region83: #{tpu_custom_call.1} parent=79 // pred_region
          %s2525 = sand.u32 %s314, 1
          %s2526 = scalar_lea.sflag [#allocation3], %s2525
          %s2527 = sand.u32 %s314, 1
          %s2528 = smul.addr %s2527, 8
          %s2529 = scalar_lea.vmem [#allocation2], %s2528
          %2530 = dma.done %s2526, 128
        $region84: #{tpu_custom_call.1} parent=79 // pred_fallthru
          _
      $region80: #{tpu_custom_call.1} parent=5 // pred_fallthru
        _
    $region6: #{tpu_custom_call.1} parent=1 // loop_footer
      %s26 = sadd.s32 1, %s22
    $region7: #{tpu_custom_call.1} parent=1 // loop_footer_branch
      %21 = sbr.rel target = $region3
    $region8: #{tpu_custom_call.1} parent=1 // loop_exit
      _
    %2531 = vsyncpa [#allocation3], 1
    %s2532 = scalar_lea.sflag [#allocation3], 1
    %2533 = vsyncpa %s2532, 1

</llo_original>
